<compile_context>
chip_gen: v6e
topology: v6e:2x2x1
jax: 0.10.0
libtpu: 0.0.40
codegen_flags: <defaults>
</compile_context>

<pallas_src>
import functools
import math

import jax
import jax.numpy as jnp
from jax import lax
from jax.experimental import pallas as pl
from jax.experimental.pallas import tpu as pltpu

# ----------------------------- config (small, shapes consistent w/ module) ---
BATCH = 2
SEQ = 8
HIDDEN = 32          # stands in for hidden_size=768
MID = 16             # stands in for mid_size=256
NUM_CLASSES = 5
NUM_LAYERS = 2
NUM_HEADS = 2
INTER = 64
VOCAB = 128
MAX_POS = 64
TYPE_VOCAB = 2
HEAD_PAD = 128       # lane-dense padded classifier output width

_VMEM = pl.BlockSpec(memory_space=pltpu.MemorySpace.VMEM)


def _vmem_limit_bytes():
    """Raise the scoped-VMEM limit while leaving headroom (v7x has 64 MiB)."""
    try:
        cap = int(pltpu.get_tpu_info().vmem_capacity_bytes)
        return min(96 * 1024 * 1024, cap * 3 // 4)
    except Exception:
        return None


_VMEM_LIMIT = _vmem_limit_bytes()


def _params(dims):
    return pltpu.CompilerParams(dimension_semantics=dims,
                                vmem_limit_bytes=_VMEM_LIMIT)


def _pick_tile(dim, candidates=(512, 256, 128, 64, 32, 16, 8)):
    """Largest tile dividing `dim` that still leaves >=2 grid steps (so the
    parallel axis shards across v7x's two TensorCores); fall back to the
    largest divisor, then to the full extent."""
    for c in candidates:
        if dim % c == 0 and dim // c >= 2:
            return c
    for c in candidates:
        if dim % c == 0:
            return c
    return dim


# ----------------------------- in-kernel helpers ------------------------------
def _gelu(y):
    # TODO(synk): exact erf-based BERT GELU replaced with tanh approximation
    # (erf lowering not guaranteed in Mosaic).
    return 0.5 * y * (1.0 + jnp.tanh(0.7978845608028654 * (y + 0.044715 * y * y * y)))


def _layernorm_f32(y, g, b):
    mu = jnp.mean(y, axis=-1, keepdims=True)
    d = y - mu
    var = jnp.mean(d * d, axis=-1, keepdims=True)
    return d * lax.rsqrt(var + 1e-12) * g + b


# ----------------------------- embeddings LayerNorm ---------------------------
def _emb_ln_kernel(x_ref, g_ref, b_ref, o_ref):
    o_ref[...] = _layernorm_f32(x_ref[...], g_ref[...], b_ref[...]).astype(o_ref.dtype)


def embedding_layernorm(x, g, b):
    """LayerNorm over the f32 embedding sum; emits bf16 activations."""
    M, H = x.shape
    TM = _pick_tile(M)
    return pl.pallas_call(
        _emb_ln_kernel,
        out_shape=jax.ShapeDtypeStruct((M, H), jnp.bfloat16),
        grid=(M // TM,),
        in_specs=[
            pl.BlockSpec((TM, H), lambda i: (i, 0)),
            pl.BlockSpec((1, H), lambda i: (0, 0)),
            pl.BlockSpec((1, H), lambda i: (0, 0)),
        ],
        out_specs=pl.BlockSpec((TM, H), lambda i: (i, 0)),
        compiler_params=_params(("parallel",)),
    )(x, g.reshape(1, H), b.reshape(1, H))


# ----------------------------- fused attention block --------------------------
def _attn_block_kernel(x_ref, wqkv_ref, bqkv_ref, wo_ref, bo_ref,
                       g_ref, be_ref, m_ref, o_ref, *, num_heads, scale):
    x = x_ref[0]                                               # [S, H] bf16
    H = x.shape[-1]
    Dh = H // num_heads

    # fused QKV projection (x is read once; one matmul; f32 accumulate)
    qkv = jnp.dot(x, wqkv_ref[...],
                  preferred_element_type=jnp.float32) + bqkv_ref[...]   # [S, 3H]
    mask = m_ref[0]                                            # [1, S] additive
    wo = wo_ref[...]                                           # [H, H] bf16

    # residual + output-projection bias, accumulated in f32
    acc = x.astype(jnp.float32) + bo_ref[...]
    for h in range(num_heads):                                 # static unroll
        # scale folded into q before the matmul (cheaper than scaling [S,S])
        qh = (qkv[:, h * Dh:(h + 1) * Dh] * scale).astype(jnp.bfloat16)
        kh = qkv[:, H + h * Dh:H + (h + 1) * Dh].astype(jnp.bfloat16)
        vh = qkv[:, 2 * H + h * Dh:2 * H + (h + 1) * Dh].astype(jnp.bfloat16)
        # scores: contract the last dims of q and k (no materialized k.T)
        s = lax.dot_general(qh, kh, (((1,), (1,)), ((), ())),
                            preferred_element_type=jnp.float32)         # [S, S]
        s = s + mask
        s = s - jnp.max(s, axis=-1, keepdims=True)
        p = jnp.exp(s)
        p = p * pl.reciprocal(jnp.sum(p, axis=-1, keepdims=True), approx=True)
        ctx_h = jnp.dot(p.astype(jnp.bfloat16), vh,
                        preferred_element_type=jnp.float32)              # [S, Dh]
        # fold the output projection per head: ctx @ wo == sum_h ctx_h @ wo[hDh:(h+1)Dh,:]
        acc = acc + jnp.dot(ctx_h.astype(jnp.bfloat16),
                            wo[h * Dh:(h + 1) * Dh, :],
                            preferred_element_type=jnp.float32)
    # residual + LayerNorm epilogue (f32), downcast only at the store
    o_ref[0] = _layernorm_f32(acc, g_ref[...], be_ref[...]).astype(o_ref.dtype)


def attention_block(x, lp, add_mask, scale):
    """Fused QKV proj + multi-head attention + out proj + residual + LN.

    x: [B, S, H] bf16; add_mask: [B, 1, S] f32.  One grid step per batch
    element processes ALL heads (amortizes launch cost, fills the MXU), and
    weights keep a fixed block index so they are only DMA'd once."""
    B, S, H = x.shape
    # TODO(synk): for long sequences this should become a flash-style kernel
    # with KV tiles + online softmax; at S<=1k the whole-S block fits VMEM.
    return pl.pallas_call(
        functools.partial(_attn_block_kernel, num_heads=NUM_HEADS, scale=scale),
        out_shape=jax.ShapeDtypeStruct((B, S, H), jnp.bfloat16),
        grid=(B,),
        in_specs=[
            pl.BlockSpec((1, S, H), lambda b: (b, 0, 0)),
            pl.BlockSpec((H, 3 * H), lambda b: (0, 0)),
            pl.BlockSpec((1, 3 * H), lambda b: (0, 0)),
            pl.BlockSpec((H, H), lambda b: (0, 0)),
            pl.BlockSpec((1, H), lambda b: (0, 0)),
            pl.BlockSpec((1, H), lambda b: (0, 0)),
            pl.BlockSpec((1, H), lambda b: (0, 0)),
            pl.BlockSpec((1, 1, S), lambda b: (b, 0, 0)),
        ],
        out_specs=pl.BlockSpec((1, S, H), lambda b: (b, 0, 0)),
        compiler_params=_params(("parallel",)),
    )(x, lp["wqkv"], lp["bqkv"].reshape(1, 3 * H), lp["wo"],
      lp["bo"].reshape(1, H), lp["ln1_g"].reshape(1, H),
      lp["ln1_b"].reshape(1, H), add_mask)


# ----------------------------- fused FFN block ---------------------------------
def _ffn_block_kernel(x_ref, wi_ref, bi_ref, wo2_ref, bo2_ref, g_ref, be_ref, o_ref):
    x = x_ref[...]                                             # [TM, H] bf16
    # up-projection + GELU; the [TM, INTER] intermediate never leaves VMEM
    h = jnp.dot(x, wi_ref[...], preferred_element_type=jnp.float32) + bi_ref[...]
    h = _gelu(h)
    # down-projection + residual + LayerNorm epilogue (f32 math)
    y = jnp.dot(h.astype(jnp.bfloat16), wo2_ref[...],
                preferred_element_type=jnp.float32)
    y = y + bo2_ref[...] + x.astype(jnp.float32)
    o_ref[...] = _layernorm_f32(y, g_ref[...], be_ref[...]).astype(o_ref.dtype)


def ffn_block(x, lp):
    """Fused FFN: LN(x + GELU(x @ wi + bi) @ wo2 + bo2).  The 4H intermediate
    never round-trips through HBM."""
    M, H = x.shape
    TM = _pick_tile(M)
    N = lp["wi"].shape[1]
    return pl.pallas_call(
        _ffn_block_kernel,
        out_shape=jax.ShapeDtypeStruct((M, H), jnp.bfloat16),
        grid=(M // TM,),
        in_specs=[
            pl.BlockSpec((TM, H), lambda i: (i, 0)),
            pl.BlockSpec((H, N), lambda i: (0, 0)),
            pl.BlockSpec((1, N), lambda i: (0, 0)),
            pl.BlockSpec((N, H), lambda i: (0, 0)),
            pl.BlockSpec((1, H), lambda i: (0, 0)),
            pl.BlockSpec((1, H), lambda i: (0, 0)),
            pl.BlockSpec((1, H), lambda i: (0, 0)),
        ],
        out_specs=pl.BlockSpec((TM, H), lambda i: (i, 0)),
        compiler_params=_params(("parallel",)),
    )(x, lp["wi"], lp["bi"].reshape(1, N), lp["wo2"],
      lp["bo2"].reshape(1, H), lp["ln2_g"].reshape(1, H), lp["ln2_b"].reshape(1, H))


# ----------------------------- pooler + classifier head ------------------------
def _head_kernel(x_ref, pw_ref, pb_ref, w1_ref, b1_ref, g_ref, be_ref,
                 rm_ref, rv_ref, w2_ref, b2_ref, o_ref):
    # pooler: dense + tanh over the [CLS] token
    pooled = jnp.tanh(
        jnp.dot(x_ref[...], pw_ref[...],
                preferred_element_type=jnp.float32) + pb_ref[...])
    # classifier: Linear -> BatchNorm1d(eval) -> ReLU -> (dropout=id) -> Linear
    h = jnp.dot(pooled.astype(jnp.bfloat16), w1_ref[...],
                preferred_element_type=jnp.float32) + b1_ref[...]
    h = (h - rm_ref[...]) * lax.rsqrt(rv_ref[...] + 1e-5) * g_ref[...] + be_ref[...]
    h = jnp.maximum(h, 0.0)
    logits = jnp.dot(h.astype(jnp.bfloat16), w2_ref[...],
                     preferred_element_type=jnp.float32) + b2_ref[...]
    # softmax in f32; padded logit columns carry a -1e30 bias -> exp underflows
    # to exactly 0, so softmax over 128 lanes == softmax over the 5 real classes.
    logits = logits - jnp.max(logits, axis=-1, keepdims=True)
    e = jnp.exp(logits)
    o_ref[...] = e / jnp.sum(e, axis=-1, keepdims=True)


def pooler_classifier_head(cls_tok, p):
    B = cls_tok.shape[0]
    out = pl.pallas_call(
        _head_kernel,
        out_shape=jax.ShapeDtypeStruct((B, HEAD_PAD), jnp.float32),
        in_specs=[_VMEM] * 11,
        out_specs=_VMEM,
        compiler_params=pltpu.CompilerParams(vmem_limit_bytes=_VMEM_LIMIT),
    )(
        cls_tok,
        p["pool_w"], p["pool_b"].reshape(1, -1),
        p["cls_w1"], p["cls_b1"].reshape(1, -1),
        p["bn_g"].reshape(1, -1), p["bn_b"].reshape(1, -1),
        p["bn_rm"].reshape(1, -1), p["bn_rv"].reshape(1, -1),
        p["cls_w2p"], p["cls_b2p"].reshape(1, -1),
    )
    return out[:, :NUM_CLASSES]


# ----------------------------- model glue --------------------------------------
@jax.jit
def bert_classifier_forward(params, context, types, mask):
    B, S = context.shape
    H = HIDDEN
    Dh = H // NUM_HEADS

    # --- BERT embeddings (gathers stay in plain JAX glue) ---
    pos_ids = jnp.arange(S)
    x = (jnp.take(params["word_emb"], context, axis=0)
         + jnp.take(params["pos_emb"], pos_ids, axis=0)[None, :, :]
         + jnp.take(params["type_emb"], types, axis=0))            # [B, S, H] f32
    x = embedding_layernorm(x.reshape(B * S, H),
                            params["emb_ln_g"], params["emb_ln_b"])  # bf16
    x = x.reshape(B, S, H)
    # embedding dropout = identity (eval)

    # additive attention mask, kept as [B, 1, S] (broadcast happens in-kernel)
    add_mask = ((1.0 - mask.astype(jnp.float32)) * -10000.0).reshape(B, 1, S)

    scale = 1.0 / math.sqrt(Dh)
    for lp in params["layers"]:
        # fused QKV + attention + out-proj + residual + LN (1 kernel / layer)
        x = attention_block(x, lp, add_mask, scale)                  # [B, S, H] bf16
        # fused FFN up + GELU + down + residual + LN (1 kernel / layer)
        x = ffn_block(x.reshape(B * S, H), lp).reshape(B, S, H)      # bf16

    # pooler + dropout(0.3)=identity + classifier head + softmax (one kernel)
    cls_tok = x[:, 0, :]                                             # [B, H] bf16
    return pooler_classifier_head(cls_tok, params)


# ----------------------------- deterministic params ----------------------------
def init_params(key):
    keys = jax.random.split(key, 128)
    it = iter(keys)

    def w(shape, scale=0.02, dtype=jnp.float32):
        return (scale * jax.random.normal(next(it), shape)).astype(dtype)

    def zeros(shape):
        return jnp.zeros(shape, jnp.float32)

    def ones(shape):
        return jnp.ones(shape, jnp.float32)

    # classifier output weights, padded to a lane-dense 128-wide output.
    # The padded bias stays f32 (-1e30 must not be downcast to bf16).
    w2 = w((MID, NUM_CLASSES))
    cls_w2p = jnp.zeros((MID, HEAD_PAD), jnp.float32).at[:, :NUM_CLASSES].set(w2)
    cls_b2p = jnp.full((HEAD_PAD,), -1e30, jnp.float32).at[:NUM_CLASSES].set(0.0)

    params = {
        "word_emb": w((VOCAB, HIDDEN)),
        "pos_emb": w((MAX_POS, HIDDEN)),
        "type_emb": w((TYPE_VOCAB, HIDDEN)),
        "emb_ln_g": ones((HIDDEN,)),
        "emb_ln_b": zeros((HIDDEN,)),
        "layers": [],
        "pool_w": w((HIDDEN, HIDDEN), dtype=jnp.bfloat16),
        "pool_b": zeros((HIDDEN,)),
        "cls_w1": w((HIDDEN, MID), dtype=jnp.bfloat16),
        "cls_b1": zeros((MID,)),
        "bn_g": ones((MID,)),
        "bn_b": zeros((MID,)),
        "bn_rm": 0.1 * w((MID,), scale=1.0),
        "bn_rv": ones((MID,)) + 0.1 * jnp.abs(w((MID,), scale=1.0)),
        "cls_w2p": cls_w2p.astype(jnp.bfloat16),
        "cls_b2p": cls_b2p,
    }
    for _ in range(NUM_LAYERS):
        params["layers"].append({
            # fused QKV weight [H, 3H] (== concat of wq, wk, wv columns)
            "wqkv": w((HIDDEN, 3 * HIDDEN), dtype=jnp.bfloat16),
            "bqkv": zeros((3 * HIDDEN,)),
            "wo": w((HIDDEN, HIDDEN), dtype=jnp.bfloat16), "bo": zeros((HIDDEN,)),
            "ln1_g": ones((HIDDEN,)), "ln1_b": zeros((HIDDEN,)),
            "wi": w((HIDDEN, INTER), dtype=jnp.bfloat16), "bi": zeros((INTER,)),
            "wo2": w((INTER, HIDDEN), dtype=jnp.bfloat16), "bo2": zeros((HIDDEN,)),
            "ln2_g": ones((HIDDEN,)), "ln2_b": zeros((HIDDEN,)),
        })
    return params


# ----------------------------- main ---------------------------------------------
if __name__ == "__main__":
    key = jax.random.PRNGKey(0)
    kp, kc = jax.random.split(key)

    params = init_params(kp)

    # x = (context_ids, token_type_ids, attention_mask), each [B, S]
    context = jax.random.randint(kc, (BATCH, SEQ), 0, VOCAB, dtype=jnp.int32)
    types = jnp.concatenate(
        [jnp.zeros((BATCH, SEQ // 2), jnp.int32), jnp.ones((BATCH, SEQ // 2), jnp.int32)],
        axis=1)
    mask = jnp.ones((BATCH, SEQ), jnp.int32).at[1, SEQ - 2:].set(0)  # some padding

    probs = bert_classifier_forward(params, context, types, mask)
    probs = jax.block_until_ready(probs)

    assert probs.shape == (BATCH, NUM_CLASSES)
    assert bool(jnp.all(jnp.isfinite(probs)))
    # rows of softmax output sum to 1 (padded logits contribute exactly 0)
    assert bool(jnp.allclose(jnp.sum(probs, axis=1), 1.0, atol=1e-5))
    print("KERNEL_OK")
</pallas_src>

<mosaic_0001>
module attributes {stable_mosaic.version = 11 : i64} {
  func.func @_attn_block_kernel(%arg0: i32, %arg1: memref<1x8x32xbf16, #tpu.memory_space<vmem>>, %arg2: memref<32x96xbf16, #tpu.memory_space<vmem>>, %arg3: memref<1x96xf32, #tpu.memory_space<vmem>>, %arg4: memref<32x32xbf16, #tpu.memory_space<vmem>>, %arg5: memref<1x32xf32, #tpu.memory_space<vmem>>, %arg6: memref<1x32xf32, #tpu.memory_space<vmem>>, %arg7: memref<1x32xf32, #tpu.memory_space<vmem>>, %arg8: memref<1x1x8xf32, #tpu.memory_space<vmem>>, %arg9: memref<1x8x32xbf16, #tpu.memory_space<vmem>>) attributes {dimension_semantics = [#tpu.dimension_semantics<parallel>], iteration_bounds = array<i64: 2>, scalar_prefetch = 0 : i64, scratch_operands = 0 : i64, tpu.core_type = #tpu.core_type<tc>, window_params = [{transform_indices = @transform_0, window_bounds = array<i64: 1, 8, 32>}, {pipeline_mode = #tpu.pipeline_mode<synchronous>, transform_indices = @transform_1, window_bounds = array<i64: 32, 96>}, {pipeline_mode = #tpu.pipeline_mode<synchronous>, transform_indices = @transform_2, window_bounds = array<i64: 1, 96>}, {pipeline_mode = #tpu.pipeline_mode<synchronous>, transform_indices = @transform_3, window_bounds = array<i64: 32, 32>}, {pipeline_mode = #tpu.pipeline_mode<synchronous>, transform_indices = @transform_4, window_bounds = array<i64: 1, 32>}, {pipeline_mode = #tpu.pipeline_mode<synchronous>, transform_indices = @transform_5, window_bounds = array<i64: 1, 32>}, {pipeline_mode = #tpu.pipeline_mode<synchronous>, transform_indices = @transform_6, window_bounds = array<i64: 1, 32>}, {transform_indices = @transform_7, window_bounds = array<i64: 1, 1, 8>}, {transform_indices = @transform_8, window_bounds = array<i64: 1, 8, 32>}]} {
    %c0 = arith.constant 0 : index
    %c0_0 = arith.constant 0 : index
    %c0_1 = arith.constant 0 : index
    %0 = vector.load %arg1[%c0, %c0_0, %c0_1] : memref<1x8x32xbf16, #tpu.memory_space<vmem>>, vector<1x8x32xbf16>
    %1 = vector.shape_cast %0 : vector<1x8x32xbf16> to vector<8x32xbf16>
    %c0_2 = arith.constant 0 : index
    %c0_3 = arith.constant 0 : index
    %2 = vector.load %arg2[%c0_2, %c0_3] : memref<32x96xbf16, #tpu.memory_space<vmem>>, vector<32x96xbf16>
    %cst = arith.constant dense<0.000000e+00> : vector<8x96xf32>
    %3 = tpu.matmul %1, %2, %cst {dimension_numbers = #tpu.dot_dimension_numbers<[1], [0], [0], [1], [0, 0, 1, 1], [], []>} : vector<8x32xbf16>, vector<32x96xbf16>, vector<8x96xf32> -> vector<8x96xf32>
    %c0_4 = arith.constant 0 : index
    %c0_5 = arith.constant 0 : index
    %4 = vector.load %arg3[%c0_4, %c0_5] : memref<1x96xf32, #tpu.memory_space<vmem>>, vector<1x96xf32>
    %5 = vector.broadcast %4 : vector<1x96xf32> to vector<8x96xf32>
    %6 = arith.addf %3, %5 : vector<8x96xf32>
    %c0_6 = arith.constant 0 : index
    %c0_7 = arith.constant 0 : index
    %c0_8 = arith.constant 0 : index
    %7 = vector.load %arg8[%c0_6, %c0_7, %c0_8] : memref<1x1x8xf32, #tpu.memory_space<vmem>>, vector<1x1x8xf32>
    %8 = vector.shape_cast %7 : vector<1x1x8xf32> to vector<1x8xf32>
    %c0_9 = arith.constant 0 : index
    %c0_10 = arith.constant 0 : index
    %9 = vector.load %arg4[%c0_9, %c0_10] : memref<32x32xbf16, #tpu.memory_space<vmem>>, vector<32x32xbf16>
    %10 = arith.extf %1 : vector<8x32xbf16> to vector<8x32xf32>
    %c0_11 = arith.constant 0 : index
    %c0_12 = arith.constant 0 : index
    %11 = vector.load %arg5[%c0_11, %c0_12] : memref<1x32xf32, #tpu.memory_space<vmem>>, vector<1x32xf32>
    %12 = vector.broadcast %11 : vector<1x32xf32> to vector<8x32xf32>
    %13 = arith.addf %10, %12 : vector<8x32xf32>
    %14 = vector.extract_strided_slice %6 {offsets = [0, 0], sizes = [8, 16], strides = [1, 1]} : vector<8x96xf32> to vector<8x16xf32>
    %cst_13 = arith.constant 2.500000e-01 : f32
    %15 = vector.broadcast %cst_13 : f32 to vector<8x16xf32>
    %16 = arith.mulf %14, %15 : vector<8x16xf32>
    %17 = arith.truncf %16 : vector<8x16xf32> to vector<8x16xbf16>
    %18 = vector.extract_strided_slice %6 {offsets = [0, 32], sizes = [8, 16], strides = [1, 1]} : vector<8x96xf32> to vector<8x16xf32>
    %19 = arith.truncf %18 : vector<8x16xf32> to vector<8x16xbf16>
    %20 = vector.extract_strided_slice %6 {offsets = [0, 64], sizes = [8, 16], strides = [1, 1]} : vector<8x96xf32> to vector<8x16xf32>
    %21 = arith.truncf %20 : vector<8x16xf32> to vector<8x16xbf16>
    %cst_14 = arith.constant dense<0.000000e+00> : vector<8x8xf32>
    %22 = tpu.matmul %17, %19, %cst_14 {dimension_numbers = #tpu.dot_dimension_numbers<[1], [1], [0], [0], [0, 0, 1, 0], [], []>} : vector<8x16xbf16>, vector<8x16xbf16>, vector<8x8xf32> -> vector<8x8xf32>
    %23 = vector.broadcast %8 : vector<1x8xf32> to vector<8x8xf32>
    %24 = arith.addf %22, %23 : vector<8x8xf32>
    %cst_15 = arith.constant dense<0xFF800000> : vector<8xf32>
    %25 = vector.multi_reduction <maximumf>, %24, %cst_15 [1] : vector<8x8xf32> to vector<8xf32>
    %26 = vector.shape_cast %25 : vector<8xf32> to vector<8x1xf32>
    %27 = vector.broadcast %26 : vector<8x1xf32> to vector<8x8xf32>
    %28 = arith.subf %24, %27 : vector<8x8xf32>
    %29 = math.exp %28 : vector<8x8xf32>
    %cst_16 = arith.constant dense<0.000000e+00> : vector<8xf32>
    %30 = vector.multi_reduction <add>, %29, %cst_16 [1] : vector<8x8xf32> to vector<8xf32>
    %31 = vector.shape_cast %30 : vector<8xf32> to vector<8x1xf32>
    %32 = tpu.reciprocal %31 {approx = true} : vector<8x1xf32> -> vector<8x1xf32>
    %33 = vector.broadcast %32 : vector<8x1xf32> to vector<8x8xf32>
    %34 = arith.mulf %29, %33 : vector<8x8xf32>
    %35 = arith.truncf %34 : vector<8x8xf32> to vector<8x8xbf16>
    %cst_17 = arith.constant dense<0.000000e+00> : vector<8x16xf32>
    %36 = tpu.matmul %35, %21, %cst_17 {dimension_numbers = #tpu.dot_dimension_numbers<[1], [0], [0], [1], [0, 0, 1, 1], [], []>} : vector<8x8xbf16>, vector<8x16xbf16>, vector<8x16xf32> -> vector<8x16xf32>
    %37 = arith.truncf %36 : vector<8x16xf32> to vector<8x16xbf16>
    %38 = vector.extract_strided_slice %9 {offsets = [0, 0], sizes = [16, 32], strides = [1, 1]} : vector<32x32xbf16> to vector<16x32xbf16>
    %cst_18 = arith.constant dense<0.000000e+00> : vector<8x32xf32>
    %39 = tpu.matmul %37, %38, %cst_18 {dimension_numbers = #tpu.dot_dimension_numbers<[1], [0], [0], [1], [0, 0, 1, 1], [], []>} : vector<8x16xbf16>, vector<16x32xbf16>, vector<8x32xf32> -> vector<8x32xf32>
    %40 = arith.addf %13, %39 : vector<8x32xf32>
    %41 = vector.extract_strided_slice %6 {offsets = [0, 16], sizes = [8, 16], strides = [1, 1]} : vector<8x96xf32> to vector<8x16xf32>
    %cst_19 = arith.constant 2.500000e-01 : f32
    %42 = vector.broadcast %cst_19 : f32 to vector<8x16xf32>
    %43 = arith.mulf %41, %42 : vector<8x16xf32>
    %44 = arith.truncf %43 : vector<8x16xf32> to vector<8x16xbf16>
    %45 = vector.extract_strided_slice %6 {offsets = [0, 48], sizes = [8, 16], strides = [1, 1]} : vector<8x96xf32> to vector<8x16xf32>
    %46 = arith.truncf %45 : vector<8x16xf32> to vector<8x16xbf16>
    %47 = vector.extract_strided_slice %6 {offsets = [0, 80], sizes = [8, 16], strides = [1, 1]} : vector<8x96xf32> to vector<8x16xf32>
    %48 = arith.truncf %47 : vector<8x16xf32> to vector<8x16xbf16>
    %cst_20 = arith.constant dense<0.000000e+00> : vector<8x8xf32>
    %49 = tpu.matmul %44, %46, %cst_20 {dimension_numbers = #tpu.dot_dimension_numbers<[1], [1], [0], [0], [0, 0, 1, 0], [], []>} : vector<8x16xbf16>, vector<8x16xbf16>, vector<8x8xf32> -> vector<8x8xf32>
    %50 = vector.broadcast %8 : vector<1x8xf32> to vector<8x8xf32>
    %51 = arith.addf %49, %50 : vector<8x8xf32>
    %cst_21 = arith.constant dense<0xFF800000> : vector<8xf32>
    %52 = vector.multi_reduction <maximumf>, %51, %cst_21 [1] : vector<8x8xf32> to vector<8xf32>
    %53 = vector.shape_cast %52 : vector<8xf32> to vector<8x1xf32>
    %54 = vector.broadcast %53 : vector<8x1xf32> to vector<8x8xf32>
    %55 = arith.subf %51, %54 : vector<8x8xf32>
    %56 = math.exp %55 : vector<8x8xf32>
    %cst_22 = arith.constant dense<0.000000e+00> : vector<8xf32>
    %57 = vector.multi_reduction <add>, %56, %cst_22 [1] : vector<8x8xf32> to vector<8xf32>
    %58 = vector.shape_cast %57 : vector<8xf32> to vector<8x1xf32>
    %59 = tpu.reciprocal %58 {approx = true} : vector<8x1xf32> -> vector<8x1xf32>
    %60 = vector.broadcast %59 : vector<8x1xf32> to vector<8x8xf32>
    %61 = arith.mulf %56, %60 : vector<8x8xf32>
    %62 = arith.truncf %61 : vector<8x8xf32> to vector<8x8xbf16>
    %cst_23 = arith.constant dense<0.000000e+00> : vector<8x16xf32>
    %63 = tpu.matmul %62, %48, %cst_23 {dimension_numbers = #tpu.dot_dimension_numbers<[1], [0], [0], [1], [0, 0, 1, 1], [], []>} : vector<8x8xbf16>, vector<8x16xbf16>, vector<8x16xf32> -> vector<8x16xf32>
    %64 = arith.truncf %63 : vector<8x16xf32> to vector<8x16xbf16>
    %65 = vector.extract_strided_slice %9 {offsets = [16, 0], sizes = [16, 32], strides = [1, 1]} : vector<32x32xbf16> to vector<16x32xbf16>
    %cst_24 = arith.constant dense<0.000000e+00> : vector<8x32xf32>
    %66 = tpu.matmul %64, %65, %cst_24 {dimension_numbers = #tpu.dot_dimension_numbers<[1], [0], [0], [1], [0, 0, 1, 1], [], []>} : vector<8x16xbf16>, vector<16x32xbf16>, vector<8x32xf32> -> vector<8x32xf32>
    %67 = arith.addf %40, %66 : vector<8x32xf32>
    %c0_25 = arith.constant 0 : index
    %c0_26 = arith.constant 0 : index
    %68 = vector.load %arg6[%c0_25, %c0_26] : memref<1x32xf32, #tpu.memory_space<vmem>>, vector<1x32xf32>
    %c0_27 = arith.constant 0 : index
    %c0_28 = arith.constant 0 : index
    %69 = vector.load %arg7[%c0_27, %c0_28] : memref<1x32xf32, #tpu.memory_space<vmem>>, vector<1x32xf32>
    %cst_29 = arith.constant dense<0.000000e+00> : vector<8xf32>
    %70 = vector.multi_reduction <add>, %67, %cst_29 [1] : vector<8x32xf32> to vector<8xf32>
    %71 = vector.shape_cast %70 : vector<8xf32> to vector<8x1xf32>
    %cst_30 = arith.constant 3.200000e+01 : f32
    %72 = vector.broadcast %cst_30 : f32 to vector<8x1xf32>
    %73 = arith.divf %71, %72 : vector<8x1xf32>
    %74 = vector.broadcast %73 : vector<8x1xf32> to vector<8x32xf32>
    %75 = arith.subf %67, %74 : vector<8x32xf32>
    %76 = arith.mulf %75, %75 : vector<8x32xf32>
    %cst_31 = arith.constant dense<0.000000e+00> : vector<8xf32>
    %77 = vector.multi_reduction <add>, %76, %cst_31 [1] : vector<8x32xf32> to vector<8xf32>
    %78 = vector.shape_cast %77 : vector<8xf32> to vector<8x1xf32>
    %cst_32 = arith.constant 3.200000e+01 : f32
    %79 = vector.broadcast %cst_32 : f32 to vector<8x1xf32>
    %80 = arith.divf %78, %79 : vector<8x1xf32>
    %cst_33 = arith.constant 9.99999996E-13 : f32
    %81 = vector.broadcast %cst_33 : f32 to vector<8x1xf32>
    %82 = arith.addf %80, %81 : vector<8x1xf32>
    %83 = math.rsqrt %82 : vector<8x1xf32>
    %84 = vector.broadcast %83 : vector<8x1xf32> to vector<8x32xf32>
    %85 = arith.mulf %75, %84 : vector<8x32xf32>
    %86 = vector.broadcast %68 : vector<1x32xf32> to vector<8x32xf32>
    %87 = arith.mulf %85, %86 : vector<8x32xf32>
    %88 = vector.broadcast %69 : vector<1x32xf32> to vector<8x32xf32>
    %89 = arith.addf %87, %88 : vector<8x32xf32>
    %90 = arith.truncf %89 : vector<8x32xf32> to vector<8x32xbf16>
    %c0_34 = arith.constant 0 : index
    %c0_35 = arith.constant 0 : index
    %c0_36 = arith.constant 0 : index
    %91 = vector.load %arg9[%c0_34, %c0_35, %c0_36] : memref<1x8x32xbf16, #tpu.memory_space<vmem>>, vector<1x8x32xbf16>
    %92 = vector.shape_cast %91 : vector<1x8x32xbf16> to vector<8x32xbf16>
    %93 = vector.shape_cast %90 : vector<8x32xbf16> to vector<1x8x32xbf16>
    tpu.vector_store %arg9[%c0_34, %c0_35, %c0_36], %93 {strides = array<i32>} : memref<1x8x32xbf16, #tpu.memory_space<vmem>>, vector<1x8x32xbf16>,
    return
  }
  func.func @transform_0(%arg0: i32) -> (i32, i32, i32) {
    %c0_i32 = arith.constant 0 : i32
    %c0_i32_0 = arith.constant 0 : i32
    %c0_i32_1 = arith.constant 0 : i32
    return %arg0, %c0_i32, %c0_i32_0 : i32, i32, i32
  }
  func.func @transform_1(%arg0: i32) -> (i32, i32) {
    %c0_i32 = arith.constant 0 : i32
    %c0_i32_0 = arith.constant 0 : i32
    %c0_i32_1 = arith.constant 0 : i32
    return %c0_i32, %c0_i32_0 : i32, i32
  }
  func.func @transform_2(%arg0: i32) -> (i32, i32) {
    %c0_i32 = arith.constant 0 : i32
    %c0_i32_0 = arith.constant 0 : i32
    %c0_i32_1 = arith.constant 0 : i32
    return %c0_i32, %c0_i32_0 : i32, i32
  }
  func.func @transform_3(%arg0: i32) -> (i32, i32) {
    %c0_i32 = arith.constant 0 : i32
    %c0_i32_0 = arith.constant 0 : i32
    %c0_i32_1 = arith.constant 0 : i32
    return %c0_i32, %c0_i32_0 : i32, i32
  }
  func.func @transform_4(%arg0: i32) -> (i32, i32) {
    %c0_i32 = arith.constant 0 : i32
    %c0_i32_0 = arith.constant 0 : i32
    %c0_i32_1 = arith.constant 0 : i32
    return %c0_i32, %c0_i32_0 : i32, i32
  }
  func.func @transform_5(%arg0: i32) -> (i32, i32) {
    %c0_i32 = arith.constant 0 : i32
    %c0_i32_0 = arith.constant 0 : i32
    %c0_i32_1 = arith.constant 0 : i32
    return %c0_i32, %c0_i32_0 : i32, i32
  }
  func.func @transform_6(%arg0: i32) -> (i32, i32) {
    %c0_i32 = arith.constant 0 : i32
    %c0_i32_0 = arith.constant 0 : i32
    %c0_i32_1 = arith.constant 0 : i32
    return %c0_i32, %c0_i32_0 : i32, i32
  }
  func.func @transform_7(%arg0: i32) -> (i32, i32, i32) {
    %c0_i32 = arith.constant 0 : i32
    %c0_i32_0 = arith.constant 0 : i32
    %c0_i32_1 = arith.constant 0 : i32
    return %arg0, %c0_i32, %c0_i32_0 : i32, i32, i32
  }
  func.func @transform_8(%arg0: i32) -> (i32, i32, i32) {
    %c0_i32 = arith.constant 0 : i32
    %c0_i32_0 = arith.constant 0 : i32
    %c0_i32_1 = arith.constant 0 : i32
    return %arg0, %c0_i32, %c0_i32_0 : i32, i32, i32
  }
}

module attributes {stable_mosaic.version = 11 : i64} {
  func.func @_emb_ln_kernel(%arg0: i32, %arg1: memref<8x32xf32, #tpu.memory_space<vmem>>, %arg2: memref<1x32xf32, #tpu.memory_space<vmem>>, %arg3: memref<1x32xf32, #tpu.memory_space<vmem>>, %arg4: memref<8x32xbf16, #tpu.memory_space<vmem>>) attributes {dimension_semantics = [#tpu.dimension_semantics<parallel>], iteration_bounds = array<i64: 2>, scalar_prefetch = 0 : i64, scratch_operands = 0 : i64, tpu.core_type = #tpu.core_type<tc>, window_params = [{transform_indices = @transform_0, window_bounds = array<i64: 8, 32>}, {pipeline_mode = #tpu.pipeline_mode<synchronous>, transform_indices = @transform_1, window_bounds = array<i64: 1, 32>}, {pipeline_mode = #tpu.pipeline_mode<synchronous>, transform_indices = @transform_2, window_bounds = array<i64: 1, 32>}, {transform_indices = @transform_3, window_bounds = array<i64: 8, 32>}]} {
    %c0 = arith.constant 0 : index
    %c0_0 = arith.constant 0 : index
    %0 = vector.load %arg1[%c0, %c0_0] : memref<8x32xf32, #tpu.memory_space<vmem>>, vector<8x32xf32>
    %c0_1 = arith.constant 0 : index
    %c0_2 = arith.constant 0 : index
    %1 = vector.load %arg2[%c0_1, %c0_2] : memref<1x32xf32, #tpu.memory_space<vmem>>, vector<1x32xf32>
    %c0_3 = arith.constant 0 : index
    %c0_4 = arith.constant 0 : index
    %2 = vector.load %arg3[%c0_3, %c0_4] : memref<1x32xf32, #tpu.memory_space<vmem>>, vector<1x32xf32>
    %cst = arith.constant dense<0.000000e+00> : vector<8xf32>
    %3 = vector.multi_reduction <add>, %0, %cst [1] : vector<8x32xf32> to vector<8xf32>
    %4 = vector.shape_cast %3 : vector<8xf32> to vector<8x1xf32>
    %cst_5 = arith.constant 3.200000e+01 : f32
    %5 = vector.broadcast %cst_5 : f32 to vector<8x1xf32>
    %6 = arith.divf %4, %5 : vector<8x1xf32>
    %7 = vector.broadcast %6 : vector<8x1xf32> to vector<8x32xf32>
    %8 = arith.subf %0, %7 : vector<8x32xf32>
    %9 = arith.mulf %8, %8 : vector<8x32xf32>
    %cst_6 = arith.constant dense<0.000000e+00> : vector<8xf32>
    %10 = vector.multi_reduction <add>, %9, %cst_6 [1] : vector<8x32xf32> to vector<8xf32>
    %11 = vector.shape_cast %10 : vector<8xf32> to vector<8x1xf32>
    %cst_7 = arith.constant 3.200000e+01 : f32
    %12 = vector.broadcast %cst_7 : f32 to vector<8x1xf32>
    %13 = arith.divf %11, %12 : vector<8x1xf32>
    %cst_8 = arith.constant 9.99999996E-13 : f32
    %14 = vector.broadcast %cst_8 : f32 to vector<8x1xf32>
    %15 = arith.addf %13, %14 : vector<8x1xf32>
    %16 = math.rsqrt %15 : vector<8x1xf32>
    %17 = vector.broadcast %16 : vector<8x1xf32> to vector<8x32xf32>
    %18 = arith.mulf %8, %17 : vector<8x32xf32>
    %19 = vector.broadcast %1 : vector<1x32xf32> to vector<8x32xf32>
    %20 = arith.mulf %18, %19 : vector<8x32xf32>
    %21 = vector.broadcast %2 : vector<1x32xf32> to vector<8x32xf32>
    %22 = arith.addf %20, %21 : vector<8x32xf32>
    %23 = arith.truncf %22 : vector<8x32xf32> to vector<8x32xbf16>
    %c0_9 = arith.constant 0 : index
    %c0_10 = arith.constant 0 : index
    %24 = vector.load %arg4[%c0_9, %c0_10] : memref<8x32xbf16, #tpu.memory_space<vmem>>, vector<8x32xbf16>
    tpu.vector_store %arg4[%c0_9, %c0_10], %23 {strides = array<i32>} : memref<8x32xbf16, #tpu.memory_space<vmem>>, vector<8x32xbf16>,
    return
  }
  func.func @transform_0(%arg0: i32) -> (i32, i32) {
    %c0_i32 = arith.constant 0 : i32
    %c0_i32_0 = arith.constant 0 : i32
    return %arg0, %c0_i32 : i32, i32
  }
  func.func @transform_1(%arg0: i32) -> (i32, i32) {
    %c0_i32 = arith.constant 0 : i32
    %c0_i32_0 = arith.constant 0 : i32
    %c0_i32_1 = arith.constant 0 : i32
    return %c0_i32, %c0_i32_0 : i32, i32
  }
  func.func @transform_2(%arg0: i32) -> (i32, i32) {
    %c0_i32 = arith.constant 0 : i32
    %c0_i32_0 = arith.constant 0 : i32
    %c0_i32_1 = arith.constant 0 : i32
    return %c0_i32, %c0_i32_0 : i32, i32
  }
  func.func @transform_3(%arg0: i32) -> (i32, i32) {
    %c0_i32 = arith.constant 0 : i32
    %c0_i32_0 = arith.constant 0 : i32
    return %arg0, %c0_i32 : i32, i32
  }
}

module attributes {stable_mosaic.version = 11 : i64} {
  func.func @_ffn_block_kernel(%arg0: i32, %arg1: memref<8x32xbf16, #tpu.memory_space<vmem>>, %arg2: memref<32x64xbf16, #tpu.memory_space<vmem>>, %arg3: memref<1x64xf32, #tpu.memory_space<vmem>>, %arg4: memref<64x32xbf16, #tpu.memory_space<vmem>>, %arg5: memref<1x32xf32, #tpu.memory_space<vmem>>, %arg6: memref<1x32xf32, #tpu.memory_space<vmem>>, %arg7: memref<1x32xf32, #tpu.memory_space<vmem>>, %arg8: memref<8x32xbf16, #tpu.memory_space<vmem>>) attributes {dimension_semantics = [#tpu.dimension_semantics<parallel>], iteration_bounds = array<i64: 2>, scalar_prefetch = 0 : i64, scratch_operands = 0 : i64, tpu.core_type = #tpu.core_type<tc>, window_params = [{transform_indices = @transform_0, window_bounds = array<i64: 8, 32>}, {pipeline_mode = #tpu.pipeline_mode<synchronous>, transform_indices = @transform_1, window_bounds = array<i64: 32, 64>}, {pipeline_mode = #tpu.pipeline_mode<synchronous>, transform_indices = @transform_2, window_bounds = array<i64: 1, 64>}, {pipeline_mode = #tpu.pipeline_mode<synchronous>, transform_indices = @transform_3, window_bounds = array<i64: 64, 32>}, {pipeline_mode = #tpu.pipeline_mode<synchronous>, transform_indices = @transform_4, window_bounds = array<i64: 1, 32>}, {pipeline_mode = #tpu.pipeline_mode<synchronous>, transform_indices = @transform_5, window_bounds = array<i64: 1, 32>}, {pipeline_mode = #tpu.pipeline_mode<synchronous>, transform_indices = @transform_6, window_bounds = array<i64: 1, 32>}, {transform_indices = @transform_7, window_bounds = array<i64: 8, 32>}]} {
    %c0 = arith.constant 0 : index
    %c0_0 = arith.constant 0 : index
    %0 = vector.load %arg1[%c0, %c0_0] : memref<8x32xbf16, #tpu.memory_space<vmem>>, vector<8x32xbf16>
    %c0_1 = arith.constant 0 : index
    %c0_2 = arith.constant 0 : index
    %1 = vector.load %arg2[%c0_1, %c0_2] : memref<32x64xbf16, #tpu.memory_space<vmem>>, vector<32x64xbf16>
    %cst = arith.constant dense<0.000000e+00> : vector<8x64xf32>
    %2 = tpu.matmul %0, %1, %cst {dimension_numbers = #tpu.dot_dimension_numbers<[1], [0], [0], [1], [0, 0, 1, 1], [], []>} : vector<8x32xbf16>, vector<32x64xbf16>, vector<8x64xf32> -> vector<8x64xf32>
    %c0_3 = arith.constant 0 : index
    %c0_4 = arith.constant 0 : index
    %3 = vector.load %arg3[%c0_3, %c0_4] : memref<1x64xf32, #tpu.memory_space<vmem>>, vector<1x64xf32>
    %4 = vector.broadcast %3 : vector<1x64xf32> to vector<8x64xf32>
    %5 = arith.addf %2, %4 : vector<8x64xf32>
    %cst_5 = arith.constant 5.000000e-01 : f32
    %6 = vector.broadcast %cst_5 : f32 to vector<8x64xf32>
    %7 = arith.mulf %6, %5 : vector<8x64xf32>
    %cst_6 = arith.constant 4.471500e-02 : f32
    %8 = vector.broadcast %cst_6 : f32 to vector<8x64xf32>
    %9 = arith.mulf %8, %5 : vector<8x64xf32>
    %10 = arith.mulf %9, %5 : vector<8x64xf32>
    %11 = arith.mulf %10, %5 : vector<8x64xf32>
    %12 = arith.addf %5, %11 : vector<8x64xf32>
    %cst_7 = arith.constant 0.797884583 : f32
    %13 = vector.broadcast %cst_7 : f32 to vector<8x64xf32>
    %14 = arith.mulf %13, %12 : vector<8x64xf32>
    %15 = math.tanh %14 : vector<8x64xf32>
    %cst_8 = arith.constant 1.000000e+00 : f32
    %16 = vector.broadcast %cst_8 : f32 to vector<8x64xf32>
    %17 = arith.addf %16, %15 : vector<8x64xf32>
    %18 = arith.mulf %7, %17 : vector<8x64xf32>
    %19 = arith.truncf %18 : vector<8x64xf32> to vector<8x64xbf16>
    %c0_9 = arith.constant 0 : index
    %c0_10 = arith.constant 0 : index
    %20 = vector.load %arg4[%c0_9, %c0_10] : memref<64x32xbf16, #tpu.memory_space<vmem>>, vector<64x32xbf16>
    %cst_11 = arith.constant dense<0.000000e+00> : vector<8x32xf32>
    %21 = tpu.matmul %19, %20, %cst_11 {dimension_numbers = #tpu.dot_dimension_numbers<[1], [0], [0], [1], [0, 0, 1, 1], [], []>} : vector<8x64xbf16>, vector<64x32xbf16>, vector<8x32xf32> -> vector<8x32xf32>
    %c0_12 = arith.constant 0 : index
    %c0_13 = arith.constant 0 : index
    %22 = vector.load %arg5[%c0_12, %c0_13] : memref<1x32xf32, #tpu.memory_space<vmem>>, vector<1x32xf32>
    %23 = vector.broadcast %22 : vector<1x32xf32> to vector<8x32xf32>
    %24 = arith.addf %21, %23 : vector<8x32xf32>
    %25 = arith.extf %0 : vector<8x32xbf16> to vector<8x32xf32>
    %26 = arith.addf %24, %25 : vector<8x32xf32>
    %c0_14 = arith.constant 0 : index
    %c0_15 = arith.constant 0 : index
    %27 = vector.load %arg6[%c0_14, %c0_15] : memref<1x32xf32, #tpu.memory_space<vmem>>, vector<1x32xf32>
    %c0_16 = arith.constant 0 : index
    %c0_17 = arith.constant 0 : index
    %28 = vector.load %arg7[%c0_16, %c0_17] : memref<1x32xf32, #tpu.memory_space<vmem>>, vector<1x32xf32>
    %cst_18 = arith.constant dense<0.000000e+00> : vector<8xf32>
    %29 = vector.multi_reduction <add>, %26, %cst_18 [1] : vector<8x32xf32> to vector<8xf32>
    %30 = vector.shape_cast %29 : vector<8xf32> to vector<8x1xf32>
    %cst_19 = arith.constant 3.200000e+01 : f32
    %31 = vector.broadcast %cst_19 : f32 to vector<8x1xf32>
    %32 = arith.divf %30, %31 : vector<8x1xf32>
    %33 = vector.broadcast %32 : vector<8x1xf32> to vector<8x32xf32>
    %34 = arith.subf %26, %33 : vector<8x32xf32>
    %35 = arith.mulf %34, %34 : vector<8x32xf32>
    %cst_20 = arith.constant dense<0.000000e+00> : vector<8xf32>
    %36 = vector.multi_reduction <add>, %35, %cst_20 [1] : vector<8x32xf32> to vector<8xf32>
    %37 = vector.shape_cast %36 : vector<8xf32> to vector<8x1xf32>
    %cst_21 = arith.constant 3.200000e+01 : f32
    %38 = vector.broadcast %cst_21 : f32 to vector<8x1xf32>
    %39 = arith.divf %37, %38 : vector<8x1xf32>
    %cst_22 = arith.constant 9.99999996E-13 : f32
    %40 = vector.broadcast %cst_22 : f32 to vector<8x1xf32>
    %41 = arith.addf %39, %40 : vector<8x1xf32>
    %42 = math.rsqrt %41 : vector<8x1xf32>
    %43 = vector.broadcast %42 : vector<8x1xf32> to vector<8x32xf32>
    %44 = arith.mulf %34, %43 : vector<8x32xf32>
    %45 = vector.broadcast %27 : vector<1x32xf32> to vector<8x32xf32>
    %46 = arith.mulf %44, %45 : vector<8x32xf32>
    %47 = vector.broadcast %28 : vector<1x32xf32> to vector<8x32xf32>
    %48 = arith.addf %46, %47 : vector<8x32xf32>
    %49 = arith.truncf %48 : vector<8x32xf32> to vector<8x32xbf16>
    %c0_23 = arith.constant 0 : index
    %c0_24 = arith.constant 0 : index
    %50 = vector.load %arg8[%c0_23, %c0_24] : memref<8x32xbf16, #tpu.memory_space<vmem>>, vector<8x32xbf16>
    tpu.vector_store %arg8[%c0_23, %c0_24], %49 {strides = array<i32>} : memref<8x32xbf16, #tpu.memory_space<vmem>>, vector<8x32xbf16>,
    return
  }
  func.func @transform_0(%arg0: i32) -> (i32, i32) {
    %c0_i32 = arith.constant 0 : i32
    %c0_i32_0 = arith.constant 0 : i32
    return %arg0, %c0_i32 : i32, i32
  }
  func.func @transform_1(%arg0: i32) -> (i32, i32) {
    %c0_i32 = arith.constant 0 : i32
    %c0_i32_0 = arith.constant 0 : i32
    %c0_i32_1 = arith.constant 0 : i32
    return %c0_i32, %c0_i32_0 : i32, i32
  }
  func.func @transform_2(%arg0: i32) -> (i32, i32) {
    %c0_i32 = arith.constant 0 : i32
    %c0_i32_0 = arith.constant 0 : i32
    %c0_i32_1 = arith.constant 0 : i32
    return %c0_i32, %c0_i32_0 : i32, i32
  }
  func.func @transform_3(%arg0: i32) -> (i32, i32) {
    %c0_i32 = arith.constant 0 : i32
    %c0_i32_0 = arith.constant 0 : i32
    %c0_i32_1 = arith.constant 0 : i32
    return %c0_i32, %c0_i32_0 : i32, i32
  }
  func.func @transform_4(%arg0: i32) -> (i32, i32) {
    %c0_i32 = arith.constant 0 : i32
    %c0_i32_0 = arith.constant 0 : i32
    %c0_i32_1 = arith.constant 0 : i32
    return %c0_i32, %c0_i32_0 : i32, i32
  }
  func.func @transform_5(%arg0: i32) -> (i32, i32) {
    %c0_i32 = arith.constant 0 : i32
    %c0_i32_0 = arith.constant 0 : i32
    %c0_i32_1 = arith.constant 0 : i32
    return %c0_i32, %c0_i32_0 : i32, i32
  }
  func.func @transform_6(%arg0: i32) -> (i32, i32) {
    %c0_i32 = arith.constant 0 : i32
    %c0_i32_0 = arith.constant 0 : i32
    %c0_i32_1 = arith.constant 0 : i32
    return %c0_i32, %c0_i32_0 : i32, i32
  }
  func.func @transform_7(%arg0: i32) -> (i32, i32) {
    %c0_i32 = arith.constant 0 : i32
    %c0_i32_0 = arith.constant 0 : i32
    return %arg0, %c0_i32 : i32, i32
  }
}

module attributes {stable_mosaic.version = 11 : i64} {
  func.func @_head_kernel(%arg0: memref<2x32xbf16, #tpu.memory_space<vmem>>, %arg1: memref<32x32xbf16, #tpu.memory_space<vmem>>, %arg2: memref<1x32xf32, #tpu.memory_space<vmem>>, %arg3: memref<32x16xbf16, #tpu.memory_space<vmem>>, %arg4: memref<1x16xf32, #tpu.memory_space<vmem>>, %arg5: memref<1x16xf32, #tpu.memory_space<vmem>>, %arg6: memref<1x16xf32, #tpu.memory_space<vmem>>, %arg7: memref<1x16xf32, #tpu.memory_space<vmem>>, %arg8: memref<1x16xf32, #tpu.memory_space<vmem>>, %arg9: memref<16x128xbf16, #tpu.memory_space<vmem>>, %arg10: memref<1x128xf32, #tpu.memory_space<vmem>>, %arg11: memref<2x128xf32, #tpu.memory_space<vmem>>) attributes {dimension_semantics = [], scalar_prefetch = 0 : i64, scratch_operands = 0 : i64, tpu.core_type = #tpu.core_type<tc>} {
    %c0 = arith.constant 0 : index
    %c0_0 = arith.constant 0 : index
    %0 = vector.load %arg0[%c0, %c0_0] : memref<2x32xbf16, #tpu.memory_space<vmem>>, vector<2x32xbf16>
    %c0_1 = arith.constant 0 : index
    %c0_2 = arith.constant 0 : index
    %1 = vector.load %arg1[%c0_1, %c0_2] : memref<32x32xbf16, #tpu.memory_space<vmem>>, vector<32x32xbf16>
    %cst = arith.constant dense<0.000000e+00> : vector<2x32xf32>
    %2 = tpu.matmul %0, %1, %cst {dimension_numbers = #tpu.dot_dimension_numbers<[1], [0], [0], [1], [0, 0, 1, 1], [], []>} : vector<2x32xbf16>, vector<32x32xbf16>, vector<2x32xf32> -> vector<2x32xf32>
    %c0_3 = arith.constant 0 : index
    %c0_4 = arith.constant 0 : index
    %3 = vector.load %arg2[%c0_3, %c0_4] : memref<1x32xf32, #tpu.memory_space<vmem>>, vector<1x32xf32>
    %4 = vector.broadcast %3 : vector<1x32xf32> to vector<2x32xf32>
    %5 = arith.addf %2, %4 : vector<2x32xf32>
    %6 = math.tanh %5 : vector<2x32xf32>
    %7 = arith.truncf %6 : vector<2x32xf32> to vector<2x32xbf16>
    %c0_5 = arith.constant 0 : index
    %c0_6 = arith.constant 0 : index
    %8 = vector.load %arg3[%c0_5, %c0_6] : memref<32x16xbf16, #tpu.memory_space<vmem>>, vector<32x16xbf16>
    %cst_7 = arith.constant dense<0.000000e+00> : vector<2x16xf32>
    %9 = tpu.matmul %7, %8, %cst_7 {dimension_numbers = #tpu.dot_dimension_numbers<[1], [0], [0], [1], [0, 0, 1, 1], [], []>} : vector<2x32xbf16>, vector<32x16xbf16>, vector<2x16xf32> -> vector<2x16xf32>
    %c0_8 = arith.constant 0 : index
    %c0_9 = arith.constant 0 : index
    %10 = vector.load %arg4[%c0_8, %c0_9] : memref<1x16xf32, #tpu.memory_space<vmem>>, vector<1x16xf32>
    %11 = vector.broadcast %10 : vector<1x16xf32> to vector<2x16xf32>
    %12 = arith.addf %9, %11 : vector<2x16xf32>
    %c0_10 = arith.constant 0 : index
    %c0_11 = arith.constant 0 : index
    %13 = vector.load %arg7[%c0_10, %c0_11] : memref<1x16xf32, #tpu.memory_space<vmem>>, vector<1x16xf32>
    %14 = vector.broadcast %13 : vector<1x16xf32> to vector<2x16xf32>
    %15 = arith.subf %12, %14 : vector<2x16xf32>
    %c0_12 = arith.constant 0 : index
    %c0_13 = arith.constant 0 : index
    %16 = vector.load %arg8[%c0_12, %c0_13] : memref<1x16xf32, #tpu.memory_space<vmem>>, vector<1x16xf32>
    %cst_14 = arith.constant 9.99999974E-6 : f32
    %17 = vector.broadcast %cst_14 : f32 to vector<1x16xf32>
    %18 = arith.addf %16, %17 : vector<1x16xf32>
    %19 = math.rsqrt %18 : vector<1x16xf32>
    %20 = vector.broadcast %19 : vector<1x16xf32> to vector<2x16xf32>
    %21 = arith.mulf %15, %20 : vector<2x16xf32>
    %c0_15 = arith.constant 0 : index
    %c0_16 = arith.constant 0 : index
    %22 = vector.load %arg5[%c0_15, %c0_16] : memref<1x16xf32, #tpu.memory_space<vmem>>, vector<1x16xf32>
    %23 = vector.broadcast %22 : vector<1x16xf32> to vector<2x16xf32>
    %24 = arith.mulf %21, %23 : vector<2x16xf32>
    %c0_17 = arith.constant 0 : index
    %c0_18 = arith.constant 0 : index
    %25 = vector.load %arg6[%c0_17, %c0_18] : memref<1x16xf32, #tpu.memory_space<vmem>>, vector<1x16xf32>
    %26 = vector.broadcast %25 : vector<1x16xf32> to vector<2x16xf32>
    %27 = arith.addf %24, %26 : vector<2x16xf32>
    %cst_19 = arith.constant 0.000000e+00 : f32
    %28 = vector.broadcast %cst_19 : f32 to vector<2x16xf32>
    %29 = arith.maximumf %27, %28 : vector<2x16xf32>
    %30 = arith.truncf %29 : vector<2x16xf32> to vector<2x16xbf16>
    %c0_20 = arith.constant 0 : index
    %c0_21 = arith.constant 0 : index
    %31 = vector.load %arg9[%c0_20, %c0_21] : memref<16x128xbf16, #tpu.memory_space<vmem>>, vector<16x128xbf16>
    %cst_22 = arith.constant dense<0.000000e+00> : vector<2x128xf32>
    %32 = tpu.matmul %30, %31, %cst_22 {dimension_numbers = #tpu.dot_dimension_numbers<[1], [0], [0], [1], [0, 0, 1, 1], [], []>} : vector<2x16xbf16>, vector<16x128xbf16>, vector<2x128xf32> -> vector<2x128xf32>
    %c0_23 = arith.constant 0 : index
    %c0_24 = arith.constant 0 : index
    %33 = vector.load %arg10[%c0_23, %c0_24] : memref<1x128xf32, #tpu.memory_space<vmem>>, vector<1x128xf32>
    %34 = vector.broadcast %33 : vector<1x128xf32> to vector<2x128xf32>
    %35 = arith.addf %32, %34 : vector<2x128xf32>
    %cst_25 = arith.constant dense<0xFF800000> : vector<2xf32>
    %36 = vector.multi_reduction <maximumf>, %35, %cst_25 [1] : vector<2x128xf32> to vector<2xf32>
    %37 = vector.shape_cast %36 : vector<2xf32> to vector<2x1xf32>
    %38 = vector.broadcast %37 : vector<2x1xf32> to vector<2x128xf32>
    %39 = arith.subf %35, %38 : vector<2x128xf32>
    %40 = math.exp %39 : vector<2x128xf32>
    %cst_26 = arith.constant dense<0.000000e+00> : vector<2xf32>
    %41 = vector.multi_reduction <add>, %40, %cst_26 [1] : vector<2x128xf32> to vector<2xf32>
    %42 = vector.shape_cast %41 : vector<2xf32> to vector<2x1xf32>
    %43 = vector.broadcast %42 : vector<2x1xf32> to vector<2x128xf32>
    %44 = arith.divf %40, %43 : vector<2x128xf32>
    %c0_27 = arith.constant 0 : index
    %c0_28 = arith.constant 0 : index
    %45 = vector.load %arg11[%c0_27, %c0_28] : memref<2x128xf32, #tpu.memory_space<vmem>>, vector<2x128xf32>
    tpu.vector_store %arg11[%c0_27, %c0_28], %44 {strides = array<i32>} : memref<2x128xf32, #tpu.memory_space<vmem>>, vector<2x128xf32>,
    return
  }
}

</mosaic_0001>

<llo_original>
// kernel: bert_classifier_forward.6
$region0: #{bert_classifier_forward.6}
  #allocation0 [shape = 'u32[]', space=smem, size = 0x4, offset = 0x4, fixed_abs, tag = 'smem constant byte address 0x4 - core index']
  #allocation1 [shape = 'u32[144,128]{1,0:T(1,128)}', space=vmem, size = 0x12000, scoped, tag = 'internal scratch']
  %s0 = inlined_call_operand.vmem [shape: f32[16,32], index: 0, kind: input, shape index: {}]
  %s1 = inlined_call_operand.vmem [shape: f32[1,32], index: 1, kind: input, shape index: {}]
  %s2 = inlined_call_operand.vmem [shape: f32[1,32], index: 2, kind: input, shape index: {}]
  %s3 = inlined_call_operand.vmem [shape: bf16[16,32], index: 3, kind: output, shape index: {}]
  %s4 = sld [smem:[#allocation0]]
  $region45: #{bert_classifier_forward.6} parent=0
    _
  %s6 = ssub.s32 1, %s4
  %s7 = scalar_select 0, %s6, %s4
  loop: start=0, step=1, limit=4
  $region2: #{bert_classifier_forward.6} parent=0 // loop_pre_header
    _
  $region3: #{bert_classifier_forward.6} parent=0 // loop_header
    %s9 = sphi 0, %s13
    %p10 = scmp.ge.s32.totalorder %s9, 4
    %s19 = sphi 0, %s21
    %s22 = sphi 0, %s19
    %s23 = sphi 0, %s22
    %s39 = sphi 0, %s23
    %s43 = sphi 0, %s43
    %s45 = sphi 0, %s43
    %s46 = sphi 0, %s45
    %s60 = sphi 0, %s46
    %s64 = sphi 0, %s64
    %s66 = sphi 0, %s64
    %s67 = sphi 0, %s66
    %s81 = sphi 0, %s67
    %s87 = sphi 0, %s89
    %s90 = sphi 0, %s87
    %s91 = sphi 0, %s90
    %s107 = sphi 0, %s91
  $region4: #{bert_classifier_forward.6} parent=0 // loop_header_branch
    %12 = sbr.rel (%p10) target = $region8
  $region5: #{bert_classifier_forward.6} parent=0 // loop_body
    %s14 = ssub.s32 %s9, 1
    %s15 = ssub.s32 %s9, 2
    %s16 = sadd.s32 %s9, 1
    %s17 = ssub.s32 %s9, %s16
    %p18 = scmp.eq.s32.totalorder %s17, 0
    %s20 = sadd.s32 %s19, 1
    %s21 = scalar_select %p18, %s19, %s20
    %p24 = pneg %p18
    %p25 = scmp.eq.s32.totalorder %s9, 1
    %p26 = por %p24, %p25
    %p27 = scmp.ne.s32.totalorder %s19, %s22
    %p28 = scmp.eq.s32.totalorder %s9, 0
    %p29 = por %p27, %p28
    %p30 = scmp.ne.s32.totalorder %s19, %s22
    %p31 = scmp.eq.s32.totalorder %s14, 1
    %p32 = por %p30, %p31
    %p33 = scmp.ne.s32.totalorder %s22, %s23
    %p34 = scmp.eq.s32.totalorder %s14, 0
    %p35 = por %p33, %p34
    %p36 = scmp.ne.s32.totalorder %s22, %s23
    %p37 = scmp.eq.s32.totalorder %s15, 1
    %p38 = por %p36, %p37
    %p40 = scmp.ne.s32.totalorder %s23, %s39
    %p41 = scmp.eq.s32.totalorder %s15, 0
    %p42 = por %p40, %p41
    %s44 = sadd.s32 %s43, 1
    %p47 = scmp.eq.s32.totalorder %s9, 1
    %p48 = scmp.ne.s32.totalorder %s43, %s45
    %p49 = scmp.eq.s32.totalorder %s9, 0
    %p50 = por %p48, %p49
    %p51 = scmp.ne.s32.totalorder %s43, %s45
    %p52 = scmp.eq.s32.totalorder %s14, 1
    %p53 = por %p51, %p52
    %p54 = scmp.ne.s32.totalorder %s45, %s46
    %p55 = scmp.eq.s32.totalorder %s14, 0
    %p56 = por %p54, %p55
    %p57 = scmp.ne.s32.totalorder %s45, %s46
    %p58 = scmp.eq.s32.totalorder %s15, 1
    %p59 = por %p57, %p58
    %p61 = scmp.ne.s32.totalorder %s46, %s60
    %p62 = scmp.eq.s32.totalorder %s15, 0
    %p63 = por %p61, %p62
    %s65 = sadd.s32 %s64, 1
    %p68 = scmp.eq.s32.totalorder %s9, 1
    %p69 = scmp.ne.s32.totalorder %s64, %s66
    %p70 = scmp.eq.s32.totalorder %s9, 0
    %p71 = por %p69, %p70
    %p72 = scmp.ne.s32.totalorder %s64, %s66
    %p73 = scmp.eq.s32.totalorder %s14, 1
    %p74 = por %p72, %p73
    %p75 = scmp.ne.s32.totalorder %s66, %s67
    %p76 = scmp.eq.s32.totalorder %s14, 0
    %p77 = por %p75, %p76
    %p78 = scmp.ne.s32.totalorder %s66, %s67
    %p79 = scmp.eq.s32.totalorder %s15, 1
    %p80 = por %p78, %p79
    %p82 = scmp.ne.s32.totalorder %s67, %s81
    %p83 = scmp.eq.s32.totalorder %s15, 0
    %p84 = por %p82, %p83
    %s85 = ssub.s32 %s9, %s16
    %p86 = scmp.eq.s32.totalorder %s85, 0
    %s88 = sadd.s32 %s87, 1
    %s89 = scalar_select %p86, %s87, %s88
    %p92 = pneg %p86
    %p93 = scmp.eq.s32.totalorder %s9, 1
    %p94 = por %p92, %p93
    %p95 = scmp.ne.s32.totalorder %s87, %s90
    %p96 = scmp.eq.s32.totalorder %s9, 0
    %p97 = por %p95, %p96
    %p98 = scmp.ne.s32.totalorder %s87, %s90
    %p99 = scmp.eq.s32.totalorder %s14, 1
    %p100 = por %p98, %p99
    %p101 = scmp.ne.s32.totalorder %s90, %s91
    %p102 = scmp.eq.s32.totalorder %s14, 0
    %p103 = por %p101, %p102
    %p104 = scmp.ne.s32.totalorder %s90, %s91
    %p105 = scmp.eq.s32.totalorder %s15, 1
    %p106 = por %p104, %p105
    %p108 = scmp.ne.s32.totalorder %s91, %s107
    %p109 = scmp.eq.s32.totalorder %s15, 0
    %p110 = por %p108, %p109
    %p111 = scmp.le.s32.totalorder 1, %s9
    %p112 = scmp.lt.s32.totalorder %s9, 3
    %p113 = pnand %p111, %p112
    %p114 = pneg %p113
    // Predicated region
    $region9: #{bert_classifier_forward.6} parent=5 // pred_check
      _
    $region10: #{bert_classifier_forward.6} parent=5 // pred_check_branch
      %116 = sbr.rel (%p113) target = $region12
    $region11: #{bert_classifier_forward.6} parent=5 // pred_region
      %s117 = ssub.s32 %s9, 1
      // Predicated region
      $region13: #{bert_classifier_forward.6} parent=11 // pred_check
        %p118 = pneg %p56
      $region14: #{bert_classifier_forward.6} parent=11 // pred_check_branch
        %120 = sbr.rel (%p118) target = $region16
      $region15: #{bert_classifier_forward.6} parent=11 // pred_region
        _
      $region16: #{bert_classifier_forward.6} parent=11 // pred_fallthru
        _
      // Predicated region
      $region17: #{bert_classifier_forward.6} parent=11 // pred_check
        %p121 = pneg %p77
      $region18: #{bert_classifier_forward.6} parent=11 // pred_check_branch
        %123 = sbr.rel (%p121) target = $region20
      $region19: #{bert_classifier_forward.6} parent=11 // pred_region
        _
      $region20: #{bert_classifier_forward.6} parent=11 // pred_fallthru
        _
    $region12: #{bert_classifier_forward.6} parent=5 // pred_fallthru
      _
    %p124 = scmp.lt.s32.totalorder %s9, 2
    // Predicated region
    $region21: #{bert_classifier_forward.6} parent=5 // pred_check
      %p125 = pneg %p124
    $region22: #{bert_classifier_forward.6} parent=5 // pred_check_branch
      %127 = sbr.rel (%p125) target = $region24
    $region23: #{bert_classifier_forward.6} parent=5 // pred_region
      // Predicated region
      $region25: #{bert_classifier_forward.6} parent=23 // pred_check
        %p128 = pneg %p29
      $region26: #{bert_classifier_forward.6} parent=23 // pred_check_branch
        %130 = sbr.rel (%p128) target = $region28
      $region27: #{bert_classifier_forward.6} parent=23 // pred_region
        %p131 = scmp.lt.s32.totalorder %s9, 1
        %s132 = scalar_select %p131, %s9, 1
        %s133 = smul.addr %s132, 8
        %s134 = scalar_lea.vmem %s0, %s133
      $region28: #{bert_classifier_forward.6} parent=23 // pred_fallthru
        _
    $region24: #{bert_classifier_forward.6} parent=5 // pred_fallthru
      _
    %p135 = scmp.le.s32.totalorder 1, %s9
    %p136 = scmp.lt.s32.totalorder %s9, 3
    %p137 = pnand %p135, %p136
    %p138 = pneg %p137
    // Predicated region
    $region29: #{bert_classifier_forward.6} parent=5 // pred_check
      _
    $region30: #{bert_classifier_forward.6} parent=5 // pred_check_branch
      %140 = sbr.rel (%p137) target = $region32
    $region31: #{bert_classifier_forward.6} parent=5 // pred_region
      %s141 = ssub.s32 %s9, 1
      %p142 = scmp.lt.s32.totalorder %s14, 1
      %s143 = scalar_select %p142, %s14, 1
      %s144 = smul.addr %s143, 8
      %s145 = scalar_lea.vmem %s0, %s144
      %p146 = pneg %p35
      %p147 = pneg %p32
      %p148 = pneg %p56
      %p149 = pneg %p53
      %p150 = pneg %p77
      %p151 = pneg %p74
      %p152 = pneg %p103
      %p153 = pneg %p100
      %p154 = scmp.lt.s32.totalorder %s14, 1
      %s155 = scalar_select %p154, %s14, 1
      %s156 = smul.addr %s155, 4
      %s157 = scalar_lea.vmem %s3, %s156
      %p158 = scmp.lt.s32.totalorder %s14, 1
      %s159 = scalar_select %p158, %s14, 1
      %s160 = smul.addr %s159, 8
      %s161 = scalar_lea.vmem %s0, %s160
      %p162 = scmp.lt.s32.totalorder %s14, 1
      %s163 = scalar_select %p162, %s14, 1
      %s164 = smul.addr %s163, 4
      %s165 = scalar_lea.vmem %s3, %s164
      %v166 = vld [vmem:[%s161] sm:$0xff]
      %v167 = vld [vmem:[%s1] sm:$0x1]
      %v168 = vld [vmem:[%s2] sm:$0x1]
      %vm169 = vcmask 261120
      %v170 = vsel %vm169, %v166, 0.0
      %171 = vadd.xlane.f32.xlu0 %v170
      %v172 = vpop.xlane.xlu0 %171
      %v173 = vrcp.pop 32.0
      %v174 = vmul.f32 %v172, %v173
      %v175 = vsub.f32 %v166, %v174
      %v176 = vmul.f32 %v175, %v175
      %v177 = vsel %vm169, %v176, 0.0
      %178 = vadd.xlane.f32.xlu0 %v177
      %v179 = vpop.xlane.xlu0 %178
      %v180 = vmul.f32 %v179, %v173
      %v181 = vadd.f32 %v180, 1e-12
      %v182 = vrsqrt.pop %v181
      %v183 = vmul.f32 %v175, %v182
      %v185 = vlaneseq
      %v186 = vshrl.u32 %v185, 7
      %v187 = vsub.s32 0, %v186
      %v188 = vrot.slane %v167, %v187
      %v190 = vmul.f32 %v183, %v188
      %v192 = vlaneseq
      %v193 = vshrl.u32 %v192, 7
      %v194 = vsub.s32 0, %v193
      %v195 = vrot.slane %v168, %v194
      %v197 = vadd.f32 %v190, %v195
      %v198 = vpack.c.bf16 %v197, %v197
      %vm199 = vcmask 257024
      %200 = vst.msk [vmem:[%s165] sm:$0xf] %vm199, %v198
      %p201 = scmp.lt.s32.totalorder %s14, 1
      %s202 = scalar_select %p201, %s14, 1
      %s203 = smul.addr %s202, 4
      %s204 = scalar_lea.vmem %s3, %s203
      // Predicated region
      $region33: #{bert_classifier_forward.6} parent=31 // pred_check
        %p205 = pneg %p100
      $region34: #{bert_classifier_forward.6} parent=31 // pred_check_branch
        %207 = sbr.rel (%p205) target = $region36
      $region35: #{bert_classifier_forward.6} parent=31 // pred_region
        _
      $region36: #{bert_classifier_forward.6} parent=31 // pred_fallthru
        _
    $region32: #{bert_classifier_forward.6} parent=5 // pred_fallthru
      _
    %p208 = scmp.le.s32.totalorder 2, %s9
    // Predicated region
    $region37: #{bert_classifier_forward.6} parent=5 // pred_check
      %p209 = pneg %p208
    $region38: #{bert_classifier_forward.6} parent=5 // pred_check_branch
      %211 = sbr.rel (%p209) target = $region40
    $region39: #{bert_classifier_forward.6} parent=5 // pred_region
      %s212 = ssub.s32 %s9, 2
      // Predicated region
      $region41: #{bert_classifier_forward.6} parent=39 // pred_check
        %p213 = pneg %p106
      $region42: #{bert_classifier_forward.6} parent=39 // pred_check_branch
        %215 = sbr.rel (%p213) target = $region44
      $region43: #{bert_classifier_forward.6} parent=39 // pred_region
        %p216 = scmp.lt.s32.totalorder %s15, 1
        %s217 = scalar_select %p216, %s15, 1
        %s218 = smul.addr %s217, 4
        %s219 = scalar_lea.vmem %s3, %s218
      $region44: #{bert_classifier_forward.6} parent=39 // pred_fallthru
        _
    $region40: #{bert_classifier_forward.6} parent=5 // pred_fallthru
      _
  $region6: #{bert_classifier_forward.6} parent=0 // loop_footer
    %s13 = sadd.s32 1, %s9
  $region7: #{bert_classifier_forward.6} parent=0 // loop_footer_branch
    %8 = sbr.rel target = $region3
  $region8: #{bert_classifier_forward.6} parent=0 // loop_exit
    _

// kernel: bert_classifier_forward.7
$region0: #{bert_classifier_forward.7}
  #allocation0 [shape = 'u32[]', space=smem, size = 0x4, offset = 0x4, fixed_abs, tag = 'smem constant byte address 0x4 - core index']
  #allocation1 [shape = 'u32[144,128]{1,0:T(1,128)}', space=vmem, size = 0x12000, scoped, tag = 'internal scratch']
  %s0 = inlined_call_operand.vmem [shape: bf16[2,8,32], index: 0, kind: input, shape index: {}]
  %s1 = inlined_call_operand.vmem [shape: bf16[32,96], index: 1, kind: input, shape index: {}]
  %s2 = inlined_call_operand.vmem [shape: f32[1,96], index: 2, kind: input, shape index: {}]
  %s3 = inlined_call_operand.vmem [shape: bf16[32,32], index: 3, kind: input, shape index: {}]
  %s4 = inlined_call_operand.vmem [shape: f32[1,32], index: 4, kind: input, shape index: {}]
  %s5 = inlined_call_operand.vmem [shape: f32[1,32], index: 5, kind: input, shape index: {}]
  %s6 = inlined_call_operand.vmem [shape: f32[1,32], index: 6, kind: input, shape index: {}]
  %s7 = inlined_call_operand.vmem [shape: f32[2,1,8], index: 7, kind: input, shape index: {}]
  %s8 = inlined_call_operand.vmem [shape: bf16[2,8,32], index: 8, kind: output, shape index: {}]
  %s9 = sld [smem:[#allocation0]]
  $region65: #{bert_classifier_forward.7} parent=0
    _
  %s11 = ssub.s32 1, %s9
  %s12 = scalar_select 0, %s11, %s9
  loop: start=0, step=1, limit=4
  $region2: #{bert_classifier_forward.7} parent=0 // loop_pre_header
    _
  $region3: #{bert_classifier_forward.7} parent=0 // loop_header
    %s14 = sphi 0, %s18
    %p15 = scmp.ge.s32.totalorder %s14, 4
    %s24 = sphi 0, %s26
    %s27 = sphi 0, %s24
    %s28 = sphi 0, %s27
    %s44 = sphi 0, %s28
    %s48 = sphi 0, %s48
    %s50 = sphi 0, %s48
    %s51 = sphi 0, %s50
    %s65 = sphi 0, %s51
    %s69 = sphi 0, %s69
    %s71 = sphi 0, %s69
    %s72 = sphi 0, %s71
    %s86 = sphi 0, %s72
    %s90 = sphi 0, %s90
    %s92 = sphi 0, %s90
    %s93 = sphi 0, %s92
    %s107 = sphi 0, %s93
    %s111 = sphi 0, %s111
    %s113 = sphi 0, %s111
    %s114 = sphi 0, %s113
    %s128 = sphi 0, %s114
    %s132 = sphi 0, %s132
    %s134 = sphi 0, %s132
    %s135 = sphi 0, %s134
    %s149 = sphi 0, %s135
    %s153 = sphi 0, %s153
    %s155 = sphi 0, %s153
    %s156 = sphi 0, %s155
    %s170 = sphi 0, %s156
    %s176 = sphi 0, %s178
    %s179 = sphi 0, %s176
    %s180 = sphi 0, %s179
    %s196 = sphi 0, %s180
    %s202 = sphi 0, %s204
    %s205 = sphi 0, %s202
    %s206 = sphi 0, %s205
    %s222 = sphi 0, %s206
  $region4: #{bert_classifier_forward.7} parent=0 // loop_header_branch
    %17 = sbr.rel (%p15) target = $region8
  $region5: #{bert_classifier_forward.7} parent=0 // loop_body
    %s19 = ssub.s32 %s14, 1
    %s20 = ssub.s32 %s14, 2
    %s21 = sadd.s32 %s14, 1
    %s22 = ssub.s32 %s14, %s21
    %p23 = scmp.eq.s32.totalorder %s22, 0
    %s25 = sadd.s32 %s24, 1
    %s26 = scalar_select %p23, %s24, %s25
    %p29 = pneg %p23
    %p30 = scmp.eq.s32.totalorder %s14, 1
    %p31 = por %p29, %p30
    %p32 = scmp.ne.s32.totalorder %s24, %s27
    %p33 = scmp.eq.s32.totalorder %s14, 0
    %p34 = por %p32, %p33
    %p35 = scmp.ne.s32.totalorder %s24, %s27
    %p36 = scmp.eq.s32.totalorder %s19, 1
    %p37 = por %p35, %p36
    %p38 = scmp.ne.s32.totalorder %s27, %s28
    %p39 = scmp.eq.s32.totalorder %s19, 0
    %p40 = por %p38, %p39
    %p41 = scmp.ne.s32.totalorder %s27, %s28
    %p42 = scmp.eq.s32.totalorder %s20, 1
    %p43 = por %p41, %p42
    %p45 = scmp.ne.s32.totalorder %s28, %s44
    %p46 = scmp.eq.s32.totalorder %s20, 0
    %p47 = por %p45, %p46
    %s49 = sadd.s32 %s48, 1
    %p52 = scmp.eq.s32.totalorder %s14, 1
    %p53 = scmp.ne.s32.totalorder %s48, %s50
    %p54 = scmp.eq.s32.totalorder %s14, 0
    %p55 = por %p53, %p54
    %p56 = scmp.ne.s32.totalorder %s48, %s50
    %p57 = scmp.eq.s32.totalorder %s19, 1
    %p58 = por %p56, %p57
    %p59 = scmp.ne.s32.totalorder %s50, %s51
    %p60 = scmp.eq.s32.totalorder %s19, 0
    %p61 = por %p59, %p60
    %p62 = scmp.ne.s32.totalorder %s50, %s51
    %p63 = scmp.eq.s32.totalorder %s20, 1
    %p64 = por %p62, %p63
    %p66 = scmp.ne.s32.totalorder %s51, %s65
    %p67 = scmp.eq.s32.totalorder %s20, 0
    %p68 = por %p66, %p67
    %s70 = sadd.s32 %s69, 1
    %p73 = scmp.eq.s32.totalorder %s14, 1
    %p74 = scmp.ne.s32.totalorder %s69, %s71
    %p75 = scmp.eq.s32.totalorder %s14, 0
    %p76 = por %p74, %p75
    %p77 = scmp.ne.s32.totalorder %s69, %s71
    %p78 = scmp.eq.s32.totalorder %s19, 1
    %p79 = por %p77, %p78
    %p80 = scmp.ne.s32.totalorder %s71, %s72
    %p81 = scmp.eq.s32.totalorder %s19, 0
    %p82 = por %p80, %p81
    %p83 = scmp.ne.s32.totalorder %s71, %s72
    %p84 = scmp.eq.s32.totalorder %s20, 1
    %p85 = por %p83, %p84
    %p87 = scmp.ne.s32.totalorder %s72, %s86
    %p88 = scmp.eq.s32.totalorder %s20, 0
    %p89 = por %p87, %p88
    %s91 = sadd.s32 %s90, 1
    %p94 = scmp.eq.s32.totalorder %s14, 1
    %p95 = scmp.ne.s32.totalorder %s90, %s92
    %p96 = scmp.eq.s32.totalorder %s14, 0
    %p97 = por %p95, %p96
    %p98 = scmp.ne.s32.totalorder %s90, %s92
    %p99 = scmp.eq.s32.totalorder %s19, 1
    %p100 = por %p98, %p99
    %p101 = scmp.ne.s32.totalorder %s92, %s93
    %p102 = scmp.eq.s32.totalorder %s19, 0
    %p103 = por %p101, %p102
    %p104 = scmp.ne.s32.totalorder %s92, %s93
    %p105 = scmp.eq.s32.totalorder %s20, 1
    %p106 = por %p104, %p105
    %p108 = scmp.ne.s32.totalorder %s93, %s107
    %p109 = scmp.eq.s32.totalorder %s20, 0
    %p110 = por %p108, %p109
    %s112 = sadd.s32 %s111, 1
    %p115 = scmp.eq.s32.totalorder %s14, 1
    %p116 = scmp.ne.s32.totalorder %s111, %s113
    %p117 = scmp.eq.s32.totalorder %s14, 0
    %p118 = por %p116, %p117
    %p119 = scmp.ne.s32.totalorder %s111, %s113
    %p120 = scmp.eq.s32.totalorder %s19, 1
    %p121 = por %p119, %p120
    %p122 = scmp.ne.s32.totalorder %s113, %s114
    %p123 = scmp.eq.s32.totalorder %s19, 0
    %p124 = por %p122, %p123
    %p125 = scmp.ne.s32.totalorder %s113, %s114
    %p126 = scmp.eq.s32.totalorder %s20, 1
    %p127 = por %p125, %p126
    %p129 = scmp.ne.s32.totalorder %s114, %s128
    %p130 = scmp.eq.s32.totalorder %s20, 0
    %p131 = por %p129, %p130
    %s133 = sadd.s32 %s132, 1
    %p136 = scmp.eq.s32.totalorder %s14, 1
    %p137 = scmp.ne.s32.totalorder %s132, %s134
    %p138 = scmp.eq.s32.totalorder %s14, 0
    %p139 = por %p137, %p138
    %p140 = scmp.ne.s32.totalorder %s132, %s134
    %p141 = scmp.eq.s32.totalorder %s19, 1
    %p142 = por %p140, %p141
    %p143 = scmp.ne.s32.totalorder %s134, %s135
    %p144 = scmp.eq.s32.totalorder %s19, 0
    %p145 = por %p143, %p144
    %p146 = scmp.ne.s32.totalorder %s134, %s135
    %p147 = scmp.eq.s32.totalorder %s20, 1
    %p148 = por %p146, %p147
    %p150 = scmp.ne.s32.totalorder %s135, %s149
    %p151 = scmp.eq.s32.totalorder %s20, 0
    %p152 = por %p150, %p151
    %s154 = sadd.s32 %s153, 1
    %p157 = scmp.eq.s32.totalorder %s14, 1
    %p158 = scmp.ne.s32.totalorder %s153, %s155
    %p159 = scmp.eq.s32.totalorder %s14, 0
    %p160 = por %p158, %p159
    %p161 = scmp.ne.s32.totalorder %s153, %s155
    %p162 = scmp.eq.s32.totalorder %s19, 1
    %p163 = por %p161, %p162
    %p164 = scmp.ne.s32.totalorder %s155, %s156
    %p165 = scmp.eq.s32.totalorder %s19, 0
    %p166 = por %p164, %p165
    %p167 = scmp.ne.s32.totalorder %s155, %s156
    %p168 = scmp.eq.s32.totalorder %s20, 1
    %p169 = por %p167, %p168
    %p171 = scmp.ne.s32.totalorder %s156, %s170
    %p172 = scmp.eq.s32.totalorder %s20, 0
    %p173 = por %p171, %p172
    %s174 = ssub.s32 %s14, %s21
    %p175 = scmp.eq.s32.totalorder %s174, 0
    %s177 = sadd.s32 %s176, 1
    %s178 = scalar_select %p175, %s176, %s177
    %p181 = pneg %p175
    %p182 = scmp.eq.s32.totalorder %s14, 1
    %p183 = por %p181, %p182
    %p184 = scmp.ne.s32.totalorder %s176, %s179
    %p185 = scmp.eq.s32.totalorder %s14, 0
    %p186 = por %p184, %p185
    %p187 = scmp.ne.s32.totalorder %s176, %s179
    %p188 = scmp.eq.s32.totalorder %s19, 1
    %p189 = por %p187, %p188
    %p190 = scmp.ne.s32.totalorder %s179, %s180
    %p191 = scmp.eq.s32.totalorder %s19, 0
    %p192 = por %p190, %p191
    %p193 = scmp.ne.s32.totalorder %s179, %s180
    %p194 = scmp.eq.s32.totalorder %s20, 1
    %p195 = por %p193, %p194
    %p197 = scmp.ne.s32.totalorder %s180, %s196
    %p198 = scmp.eq.s32.totalorder %s20, 0
    %p199 = por %p197, %p198
    %s200 = ssub.s32 %s14, %s21
    %p201 = scmp.eq.s32.totalorder %s200, 0
    %s203 = sadd.s32 %s202, 1
    %s204 = scalar_select %p201, %s202, %s203
    %p207 = pneg %p201
    %p208 = scmp.eq.s32.totalorder %s14, 1
    %p209 = por %p207, %p208
    %p210 = scmp.ne.s32.totalorder %s202, %s205
    %p211 = scmp.eq.s32.totalorder %s14, 0
    %p212 = por %p210, %p211
    %p213 = scmp.ne.s32.totalorder %s202, %s205
    %p214 = scmp.eq.s32.totalorder %s19, 1
    %p215 = por %p213, %p214
    %p216 = scmp.ne.s32.totalorder %s205, %s206
    %p217 = scmp.eq.s32.totalorder %s19, 0
    %p218 = por %p216, %p217
    %p219 = scmp.ne.s32.totalorder %s205, %s206
    %p220 = scmp.eq.s32.totalorder %s20, 1
    %p221 = por %p219, %p220
    %p223 = scmp.ne.s32.totalorder %s206, %s222
    %p224 = scmp.eq.s32.totalorder %s20, 0
    %p225 = por %p223, %p224
    %p226 = scmp.le.s32.totalorder 1, %s14
    %p227 = scmp.lt.s32.totalorder %s14, 3
    %p228 = pnand %p226, %p227
    %p229 = pneg %p228
    // Predicated region
    $region9: #{bert_classifier_forward.7} parent=5 // pred_check
      _
    $region10: #{bert_classifier_forward.7} parent=5 // pred_check_branch
      %231 = sbr.rel (%p228) target = $region12
    $region11: #{bert_classifier_forward.7} parent=5 // pred_region
      %s232 = ssub.s32 %s14, 1
      // Predicated region
      $region13: #{bert_classifier_forward.7} parent=11 // pred_check
        %p233 = pneg %p61
      $region14: #{bert_classifier_forward.7} parent=11 // pred_check_branch
        %235 = sbr.rel (%p233) target = $region16
      $region15: #{bert_classifier_forward.7} parent=11 // pred_region
        _
      $region16: #{bert_classifier_forward.7} parent=11 // pred_fallthru
        _
      // Predicated region
      $region17: #{bert_classifier_forward.7} parent=11 // pred_check
        %p236 = pneg %p82
      $region18: #{bert_classifier_forward.7} parent=11 // pred_check_branch
        %238 = sbr.rel (%p236) target = $region20
      $region19: #{bert_classifier_forward.7} parent=11 // pred_region
        _
      $region20: #{bert_classifier_forward.7} parent=11 // pred_fallthru
        _
      // Predicated region
      $region21: #{bert_classifier_forward.7} parent=11 // pred_check
        %p239 = pneg %p103
      $region22: #{bert_classifier_forward.7} parent=11 // pred_check_branch
        %241 = sbr.rel (%p239) target = $region24
      $region23: #{bert_classifier_forward.7} parent=11 // pred_region
        _
      $region24: #{bert_classifier_forward.7} parent=11 // pred_fallthru
        _
      // Predicated region
      $region25: #{bert_classifier_forward.7} parent=11 // pred_check
        %p242 = pneg %p124
      $region26: #{bert_classifier_forward.7} parent=11 // pred_check_branch
        %244 = sbr.rel (%p242) target = $region28
      $region27: #{bert_classifier_forward.7} parent=11 // pred_region
        _
      $region28: #{bert_classifier_forward.7} parent=11 // pred_fallthru
        _
      // Predicated region
      $region29: #{bert_classifier_forward.7} parent=11 // pred_check
        %p245 = pneg %p145
      $region30: #{bert_classifier_forward.7} parent=11 // pred_check_branch
        %247 = sbr.rel (%p245) target = $region32
      $region31: #{bert_classifier_forward.7} parent=11 // pred_region
        _
      $region32: #{bert_classifier_forward.7} parent=11 // pred_fallthru
        _
      // Predicated region
      $region33: #{bert_classifier_forward.7} parent=11 // pred_check
        %p248 = pneg %p166
      $region34: #{bert_classifier_forward.7} parent=11 // pred_check_branch
        %250 = sbr.rel (%p248) target = $region36
      $region35: #{bert_classifier_forward.7} parent=11 // pred_region
        _
      $region36: #{bert_classifier_forward.7} parent=11 // pred_fallthru
        _
    $region12: #{bert_classifier_forward.7} parent=5 // pred_fallthru
      _
    %p251 = scmp.lt.s32.totalorder %s14, 2
    // Predicated region
    $region37: #{bert_classifier_forward.7} parent=5 // pred_check
      %p252 = pneg %p251
    $region38: #{bert_classifier_forward.7} parent=5 // pred_check_branch
      %254 = sbr.rel (%p252) target = $region40
    $region39: #{bert_classifier_forward.7} parent=5 // pred_region
      // Predicated region
      $region41: #{bert_classifier_forward.7} parent=39 // pred_check
        %p255 = pneg %p34
      $region42: #{bert_classifier_forward.7} parent=39 // pred_check_branch
        %257 = sbr.rel (%p255) target = $region44
      $region43: #{bert_classifier_forward.7} parent=39 // pred_region
        %p258 = scmp.lt.s32.totalorder %s14, 1
        %s259 = scalar_select %p258, %s14, 1
        %s260 = smul.addr %s259, 4
        %s261 = scalar_lea.vmem %s0, %s260
      $region44: #{bert_classifier_forward.7} parent=39 // pred_fallthru
        _
      // Predicated region
      $region45: #{bert_classifier_forward.7} parent=39 // pred_check
        %p262 = pneg %p186
      $region46: #{bert_classifier_forward.7} parent=39 // pred_check_branch
        %264 = sbr.rel (%p262) target = $region48
      $region47: #{bert_classifier_forward.7} parent=39 // pred_region
        %p265 = scmp.lt.s32.totalorder %s14, 1
        %s266 = scalar_select %p265, %s14, 1
        %s267 = scalar_lea.vmem %s7, %s266
      $region48: #{bert_classifier_forward.7} parent=39 // pred_fallthru
        _
    $region40: #{bert_classifier_forward.7} parent=5 // pred_fallthru
      _
    %p268 = scmp.le.s32.totalorder 1, %s14
    %p269 = scmp.lt.s32.totalorder %s14, 3
    %p270 = pnand %p268, %p269
    %p271 = pneg %p270
    // Predicated region
    $region49: #{bert_classifier_forward.7} parent=5 // pred_check
      _
    $region50: #{bert_classifier_forward.7} parent=5 // pred_check_branch
      %273 = sbr.rel (%p270) target = $region52
    $region51: #{bert_classifier_forward.7} parent=5 // pred_region
      %s274 = ssub.s32 %s14, 1
      %p275 = scmp.lt.s32.totalorder %s19, 1
      %s276 = scalar_select %p275, %s19, 1
      %s277 = smul.addr %s276, 4
      %s278 = scalar_lea.vmem %s0, %s277
      %p279 = pneg %p40
      %p280 = pneg %p37
      %p281 = pneg %p61
      %p282 = pneg %p58
      %p283 = pneg %p82
      %p284 = pneg %p79
      %p285 = pneg %p103
      %p286 = pneg %p100
      %p287 = pneg %p124
      %p288 = pneg %p121
      %p289 = pneg %p145
      %p290 = pneg %p142
      %p291 = pneg %p166
      %p292 = pneg %p163
      %p293 = scmp.lt.s32.totalorder %s19, 1
      %s294 = scalar_select %p293, %s19, 1
      %s295 = scalar_lea.vmem %s7, %s294
      %p296 = pneg %p192
      %p297 = pneg %p189
      %p298 = pneg %p218
      %p299 = pneg %p215
      %p300 = scmp.lt.s32.totalorder %s19, 1
      %s301 = scalar_select %p300, %s19, 1
      %s302 = smul.addr %s301, 4
      %s303 = scalar_lea.vmem %s8, %s302
      %p304 = scmp.lt.s32.totalorder %s19, 1
      %s305 = scalar_select %p304, %s19, 1
      %s306 = smul.addr %s305, 4
      %s307 = scalar_lea.vmem %s0, %s306
      %p308 = scmp.lt.s32.totalorder %s19, 1
      %s309 = scalar_select %p308, %s19, 1
      %s310 = scalar_lea.vmem %s7, %s309
      %p311 = scmp.lt.s32.totalorder %s19, 1
      %s312 = scalar_select %p311, %s19, 1
      %s313 = smul.addr %s312, 4
      %s314 = scalar_lea.vmem %s8, %s313
      %v316 = vld [vmem:[%s307] sm:$0xf]
      %v317 = vld [vmem:[%s1] sm:$0xf]
      %v318 = vld [vmem:[%s1 + $0x4] sm:$0xf]
      %v319 = vld [vmem:[%s1 + $0x8] sm:$0xf]
      %v320 = vld [vmem:[%s1 + $0xc] sm:$0xf]
      %v321 = vld [vmem:[%s2] sm:$0x1]
      %v323 = vlaneseq
      %v324 = vshrl.u32 %v323, 7
      %v325 = vsub.s32 0, %v324
      %v326 = vrot.slane %v321, %v325
      %v332 = vunpack.c.l.b16 %v317
      %v333 = vunpack.c.l.b16 %v318
      %v334 = vunpack.c.l.b16 %v319
      %v335 = vunpack.c.l.b16 %v320
      %v336 = vpack.c.b16 %v333, %v332
      %v337 = vpack.c.b16 %v335, %v334
      %vm340 = vcmask 261120
      %v342 = vsel %vm340, %v316, 0
      %344 = vmatprep.subr.bf16.mxu0 0
      %345 = vmatpush1.bf16.msra.mxu0 0
      %346 = vmatprep.subr.bf16.mxu0 0
      %347 = vmatpush1.bf16.msra.mxu0 0
      %348 = vmatprep.subr.bf16.mxu0 0
      %349 = vmatpush1.bf16.msra.mxu0 0
      %350 = vmatprep.subr.bf16.mxu0 0
      %351 = vmatpush1.bf16.msra.mxu0 0
      %352 = vmatprep.subr.bf16.mxu0 0
      %353 = vmatpush1.bf16.msra.mxu0 0
      %354 = vmatprep.subr.bf16.mxu0 0
      %355 = vmatpush1.bf16.msra.mxu0 0
      %356 = vmatprep.subr.bf16.mxu0 0
      %357 = vmatpush1.bf16.msra.mxu0 %v337
      %358 = vmatprep.subr.bf16.mxu0 0
      %359 = vmatpush1.bf16.msra.mxu0 %v336
      %360 = vmatprep.subr.bf16.mxu0 0
      %361 = vmatpush2.bf16.msra.mxu0 0
      %362 = vmatprep.subr.bf16.mxu0 0
      %363 = vmatpush2.bf16.msra.mxu0 0
      %364 = vmatprep.subr.bf16.mxu0 0
      %365 = vmatpush2.bf16.msra.mxu0 0
      %366 = vmatprep.subr.bf16.mxu0 0
      %367 = vmatpush2.bf16.msra.mxu0 0
      %368 = vmatprep.subr.bf16.mxu0 0
      %369 = vmatpush2.bf16.msra.mxu0 0
      %370 = vmatprep.subr.bf16.mxu0 0
      %371 = vmatpush2.bf16.msra.mxu0 0
      %372 = vmatprep.subr.bf16.mxu0 0
      %373 = vmatpush2.bf16.msra.mxu0 0
      %374 = vmatprep.subr.bf16.mxu0 0
      %375 = vmatpush2.bf16.msra.mxu0 0
      %376 = vmatprep.mubr.bf16.mxu0 0
      %377 = vmatmul.mubr.bf16.gmra.mxu0 %v342
      %v378 = vpop.f32.mrf.mxu0
      %v379 = vadd.f32 %v326, %v378
      %v380 = vpop.f32.mrf.mxu0
      %v381 = vpop.f32.mrf.mxu0
      %v382 = vpop.f32.mrf.mxu0
      %383 = vdwg.mxu0
      %v384 = vld [vmem:[%s310] sm:$0x1]
      %v385 = vld [vmem:[%s3] sm:$0xf]
      %v386 = vld [vmem:[%s3 + $0x4] sm:$0xf]
      %v387 = vld [vmem:[%s3 + $0x8] sm:$0xf]
      %v388 = vld [vmem:[%s3 + $0xc] sm:$0xf]
      %v389 = vunpack.c.l.bf16 %v316
      %v390 = vld [vmem:[%s4] sm:$0x1]
      %v392 = vlaneseq
      %v393 = vshrl.u32 %v392, 7
      %v394 = vsub.s32 0, %v393
      %v395 = vrot.slane %v390, %v394
      %v397 = vadd.f32 %v389, %v395
      %v398 = vmul.f32 %v379, 0.25
      %v399 = vpack.c.bf16 %v398, %v398
      %v400 = vpack.c.bf16 %v379, %v379
      %v402 = vlaneseq
      %v403 = vshrl.u32 %v402, 7
      %v404 = vsub.s32 0, %v403
      %v405 = vrot.slane %v384, %v404
      %408 = vrot.lane.b32.xlu0 %v400, 96
      %v409 = vpop.permute.xlu0 %408
      %vm410 = vcmask 130048
      %v412 = vsel %vm410, %v399, 0
      %v415 = vsel %vm410, %v409, 0
      %417 = vmatprep.subr.bf16.mxu0 0
      %418 = vmatpush1.bf16.xpose.msra.mxu0 0
      %419 = vmatprep.subr.bf16.mxu0 0
      %420 = vmatpush1.bf16.xpose.msra.mxu0 0
      %421 = vmatprep.subr.bf16.mxu0 0
      %422 = vmatpush1.bf16.xpose.msra.mxu0 0
      %423 = vmatprep.subr.bf16.mxu0 0
      %424 = vmatpush1.bf16.xpose.msra.mxu0 0
      %425 = vmatprep.subr.bf16.mxu0 0
      %426 = vmatpush1.bf16.xpose.msra.mxu0 0
      %427 = vmatprep.subr.bf16.mxu0 0
      %428 = vmatpush1.bf16.xpose.msra.mxu0 0
      %429 = vmatprep.subr.bf16.mxu0 0
      %430 = vmatpush1.bf16.xpose.msra.mxu0 0
      %431 = vmatprep.subr.bf16.mxu0 0
      %432 = vmatpush1.bf16.xpose.msra.mxu0 %v415
      %433 = vmatprep.subr.bf16.mxu0 0
      %434 = vmatpush2.bf16.xpose.msra.mxu0 0
      %435 = vmatprep.subr.bf16.mxu0 0
      %436 = vmatpush2.bf16.xpose.msra.mxu0 0
      %437 = vmatprep.subr.bf16.mxu0 0
      %438 = vmatpush2.bf16.xpose.msra.mxu0 0
      %439 = vmatprep.subr.bf16.mxu0 0
      %440 = vmatpush2.bf16.xpose.msra.mxu0 0
      %441 = vmatprep.subr.bf16.mxu0 0
      %442 = vmatpush2.bf16.xpose.msra.mxu0 0
      %443 = vmatprep.subr.bf16.mxu0 0
      %444 = vmatpush2.bf16.xpose.msra.mxu0 0
      %445 = vmatprep.subr.bf16.mxu0 0
      %446 = vmatpush2.bf16.xpose.msra.mxu0 0
      %447 = vmatprep.subr.bf16.mxu0 0
      %448 = vmatpush2.bf16.xpose.msra.mxu0 0
      %449 = vmatprep.mubr.bf16.mxu0 0
      %450 = vmatmul.mubr.bf16.gmra.mxu0 %v412
      %v451 = vpop.f32.mrf.mxu0
      %v452 = vadd.f32 %v405, %v451
      %v453 = vpop.f32.mrf.mxu0
      %v454 = vpop.f32.mrf.mxu0
      %v455 = vpop.f32.mrf.mxu0
      %456 = vdwg.mxu0
      %vm457 = vcmask 64512
      %v458 = vsel %vm457, %v452, -inf
      %459 = vmax.xlane.f32.xlu0 %v458
      %v460 = vpop.xlane.xlu0 %459
      %v461 = vsub.f32 %v452, %v460
      %v462 = vmul.f32 %v461, 1.442695
      %v463 = vpow.pop %v462
      %v464 = vsel %vm457, %v463, 0.0
      %465 = vadd.xlane.f32.xlu0 %v464
      %v466 = vpop.xlane.xlu0 %465
      %v467 = vrcp.pop %v466
      %v468 = vmul.f32 %v463, %v467
      %v469 = vpack.c.bf16 %v468, %v468
      %470 = vrot.lane.b32.xlu0 %v400, 64
      %v471 = vpop.permute.xlu0 %470
      %v473 = vsel %vm457, %v469, 0
      %vm475 = vcmask 1043456
      %v477 = vsel %vm475, %v471, 0
      %479 = vmatprep.subr.bf16.mxu0 0
      %480 = vmatpush1.bf16.msra.mxu0 0
      %481 = vmatprep.subr.bf16.mxu0 0
      %482 = vmatpush1.bf16.msra.mxu0 0
      %483 = vmatprep.subr.bf16.mxu0 0
      %484 = vmatpush1.bf16.msra.mxu0 0
      %485 = vmatprep.subr.bf16.mxu0 0
      %486 = vmatpush1.bf16.msra.mxu0 0
      %487 = vmatprep.subr.bf16.mxu0 0
      %488 = vmatpush1.bf16.msra.mxu0 0
      %489 = vmatprep.subr.bf16.mxu0 0
      %490 = vmatpush1.bf16.msra.mxu0 0
      %491 = vmatprep.subr.bf16.mxu0 0
      %492 = vmatpush1.bf16.msra.mxu0 0
      %493 = vmatprep.subr.bf16.mxu0 0
      %494 = vmatpush1.bf16.msra.mxu0 %v477
      %495 = vmatprep.subr.bf16.mxu0 0
      %496 = vmatpush2.bf16.msra.mxu0 0
      %497 = vmatprep.subr.bf16.mxu0 0
      %498 = vmatpush2.bf16.msra.mxu0 0
      %499 = vmatprep.subr.bf16.mxu0 0
      %500 = vmatpush2.bf16.msra.mxu0 0
      %501 = vmatprep.subr.bf16.mxu0 0
      %502 = vmatpush2.bf16.msra.mxu0 0
      %503 = vmatprep.subr.bf16.mxu0 0
      %504 = vmatpush2.bf16.msra.mxu0 0
      %505 = vmatprep.subr.bf16.mxu0 0
      %506 = vmatpush2.bf16.msra.mxu0 0
      %507 = vmatprep.subr.bf16.mxu0 0
      %508 = vmatpush2.bf16.msra.mxu0 0
      %509 = vmatprep.subr.bf16.mxu0 0
      %510 = vmatpush2.bf16.msra.mxu0 0
      %511 = vmatprep.mubr.bf16.mxu0 0
      %512 = vmatmul.mubr.bf16.gmra.mxu0 %v473
      %v513 = vpop.f32.mrf.mxu0
      %v514 = vadd.f32 0.0, %v513
      %v515 = vpop.f32.mrf.mxu0
      %v516 = vpop.f32.mrf.mxu0
      %v517 = vpop.f32.mrf.mxu0
      %518 = vdwg.mxu0
      %v519 = vpack.c.bf16 %v514, %v514
      %v522 = vunpack.c.l.b16 %v385
      %v523 = vunpack.c.l.b16 %v386
      %v524 = vpack.c.b16 %v523, %v522
      %v527 = vsel %vm410, %v519, 0
      %529 = vmatprep.subr.bf16.mxu0 0
      %530 = vmatpush1.bf16.msra.mxu0 0
      %531 = vmatprep.subr.bf16.mxu0 0
      %532 = vmatpush1.bf16.msra.mxu0 0
      %533 = vmatprep.subr.bf16.mxu0 0
      %534 = vmatpush1.bf16.msra.mxu0 0
      %535 = vmatprep.subr.bf16.mxu0 0
      %536 = vmatpush1.bf16.msra.mxu0 0
      %537 = vmatprep.subr.bf16.mxu0 0
      %538 = vmatpush1.bf16.msra.mxu0 0
      %539 = vmatprep.subr.bf16.mxu0 0
      %540 = vmatpush1.bf16.msra.mxu0 0
      %541 = vmatprep.subr.bf16.mxu0 0
      %542 = vmatpush1.bf16.msra.mxu0 0
      %543 = vmatprep.subr.bf16.mxu0 0
      %544 = vmatpush1.bf16.msra.mxu0 %v524
      %545 = vmatprep.subr.bf16.mxu0 0
      %546 = vmatpush2.bf16.msra.mxu0 0
      %547 = vmatprep.subr.bf16.mxu0 0
      %548 = vmatpush2.bf16.msra.mxu0 0
      %549 = vmatprep.subr.bf16.mxu0 0
      %550 = vmatpush2.bf16.msra.mxu0 0
      %551 = vmatprep.subr.bf16.mxu0 0
      %552 = vmatpush2.bf16.msra.mxu0 0
      %553 = vmatprep.subr.bf16.mxu0 0
      %554 = vmatpush2.bf16.msra.mxu0 0
      %555 = vmatprep.subr.bf16.mxu0 0
      %556 = vmatpush2.bf16.msra.mxu0 0
      %557 = vmatprep.subr.bf16.mxu0 0
      %558 = vmatpush2.bf16.msra.mxu0 0
      %559 = vmatprep.subr.bf16.mxu0 0
      %560 = vmatpush2.bf16.msra.mxu0 0
      %561 = vmatprep.mubr.bf16.mxu0 0
      %562 = vmatmul.mubr.bf16.gmra.mxu0 %v527
      %v563 = vpop.f32.mrf.mxu0
      %v564 = vadd.f32 0.0, %v563
      %v565 = vpop.f32.mrf.mxu0
      %v566 = vpop.f32.mrf.mxu0
      %v567 = vpop.f32.mrf.mxu0
      %568 = vdwg.mxu0
      %v569 = vadd.f32 %v397, %v564
      %571 = vrot.lane.b32.xlu0 %v399, 112
      %v572 = vpop.permute.xlu0 %571
      %573 = vrot.lane.b32.xlu0 %v400, 80
      %v574 = vpop.permute.xlu0 %573
      %v576 = vsel %vm410, %v572, 0
      %v579 = vsel %vm410, %v574, 0
      %581 = vmatprep.subr.bf16.mxu0 0
      %582 = vmatpush1.bf16.xpose.msra.mxu0 0
      %583 = vmatprep.subr.bf16.mxu0 0
      %584 = vmatpush1.bf16.xpose.msra.mxu0 0
      %585 = vmatprep.subr.bf16.mxu0 0
      %586 = vmatpush1.bf16.xpose.msra.mxu0 0
      %587 = vmatprep.subr.bf16.mxu0 0
      %588 = vmatpush1.bf16.xpose.msra.mxu0 0
      %589 = vmatprep.subr.bf16.mxu0 0
      %590 = vmatpush1.bf16.xpose.msra.mxu0 0
      %591 = vmatprep.subr.bf16.mxu0 0
      %592 = vmatpush1.bf16.xpose.msra.mxu0 0
      %593 = vmatprep.subr.bf16.mxu0 0
      %594 = vmatpush1.bf16.xpose.msra.mxu0 0
      %595 = vmatprep.subr.bf16.mxu0 0
      %596 = vmatpush1.bf16.xpose.msra.mxu0 %v579
      %597 = vmatprep.subr.bf16.mxu0 0
      %598 = vmatpush2.bf16.xpose.msra.mxu0 0
      %599 = vmatprep.subr.bf16.mxu0 0
      %600 = vmatpush2.bf16.xpose.msra.mxu0 0
      %601 = vmatprep.subr.bf16.mxu0 0
      %602 = vmatpush2.bf16.xpose.msra.mxu0 0
      %603 = vmatprep.subr.bf16.mxu0 0
      %604 = vmatpush2.bf16.xpose.msra.mxu0 0
      %605 = vmatprep.subr.bf16.mxu0 0
      %606 = vmatpush2.bf16.xpose.msra.mxu0 0
      %607 = vmatprep.subr.bf16.mxu0 0
      %608 = vmatpush2.bf16.xpose.msra.mxu0 0
      %609 = vmatprep.subr.bf16.mxu0 0
      %610 = vmatpush2.bf16.xpose.msra.mxu0 0
      %611 = vmatprep.subr.bf16.mxu0 0
      %612 = vmatpush2.bf16.xpose.msra.mxu0 0
      %613 = vmatprep.mubr.bf16.mxu0 0
      %614 = vmatmul.mubr.bf16.gmra.mxu0 %v576
      %v615 = vpop.f32.mrf.mxu0
      %v616 = vadd.f32 %v405, %v615
      %v617 = vpop.f32.mrf.mxu0
      %v618 = vpop.f32.mrf.mxu0
      %v619 = vpop.f32.mrf.mxu0
      %620 = vdwg.mxu0
      %v621 = vsel %vm457, %v616, -inf
      %622 = vmax.xlane.f32.xlu0 %v621
      %v623 = vpop.xlane.xlu0 %622
      %v624 = vsub.f32 %v616, %v623
      %v625 = vmul.f32 %v624, 1.442695
      %v626 = vpow.pop %v625
      %v627 = vsel %vm457, %v626, 0.0
      %628 = vadd.xlane.f32.xlu0 %v627
      %v629 = vpop.xlane.xlu0 %628
      %v630 = vrcp.pop %v629
      %v631 = vmul.f32 %v626, %v630
      %v632 = vpack.c.bf16 %v631, %v631
      %633 = vrot.lane.b32.xlu0 %v400, 48
      %v634 = vpop.permute.xlu0 %633
      %v636 = vsel %vm457, %v632, 0
      %v639 = vsel %vm475, %v634, 0
      %641 = vmatprep.subr.bf16.mxu0 0
      %642 = vmatpush1.bf16.msra.mxu0 0
      %643 = vmatprep.subr.bf16.mxu0 0
      %644 = vmatpush1.bf16.msra.mxu0 0
      %645 = vmatprep.subr.bf16.mxu0 0
      %646 = vmatpush1.bf16.msra.mxu0 0
      %647 = vmatprep.subr.bf16.mxu0 0
      %648 = vmatpush1.bf16.msra.mxu0 0
      %649 = vmatprep.subr.bf16.mxu0 0
      %650 = vmatpush1.bf16.msra.mxu0 0
      %651 = vmatprep.subr.bf16.mxu0 0
      %652 = vmatpush1.bf16.msra.mxu0 0
      %653 = vmatprep.subr.bf16.mxu0 0
      %654 = vmatpush1.bf16.msra.mxu0 0
      %655 = vmatprep.subr.bf16.mxu0 0
      %656 = vmatpush1.bf16.msra.mxu0 %v639
      %657 = vmatprep.subr.bf16.mxu0 0
      %658 = vmatpush2.bf16.msra.mxu0 0
      %659 = vmatprep.subr.bf16.mxu0 0
      %660 = vmatpush2.bf16.msra.mxu0 0
      %661 = vmatprep.subr.bf16.mxu0 0
      %662 = vmatpush2.bf16.msra.mxu0 0
      %663 = vmatprep.subr.bf16.mxu0 0
      %664 = vmatpush2.bf16.msra.mxu0 0
      %665 = vmatprep.subr.bf16.mxu0 0
      %666 = vmatpush2.bf16.msra.mxu0 0
      %667 = vmatprep.subr.bf16.mxu0 0
      %668 = vmatpush2.bf16.msra.mxu0 0
      %669 = vmatprep.subr.bf16.mxu0 0
      %670 = vmatpush2.bf16.msra.mxu0 0
      %671 = vmatprep.subr.bf16.mxu0 0
      %672 = vmatpush2.bf16.msra.mxu0 0
      %673 = vmatprep.mubr.bf16.mxu0 0
      %674 = vmatmul.mubr.bf16.gmra.mxu0 %v636
      %v675 = vpop.f32.mrf.mxu0
      %v676 = vadd.f32 0.0, %v675
      %v677 = vpop.f32.mrf.mxu0
      %v678 = vpop.f32.mrf.mxu0
      %v679 = vpop.f32.mrf.mxu0
      %680 = vdwg.mxu0
      %v681 = vpack.c.bf16 %v676, %v676
      %v684 = vunpack.c.l.b16 %v387
      %v685 = vunpack.c.l.b16 %v388
      %v686 = vpack.c.b16 %v685, %v684
      %v689 = vsel %vm410, %v681, 0
      %691 = vmatprep.subr.bf16.mxu0 0
      %692 = vmatpush1.bf16.msra.mxu0 0
      %693 = vmatprep.subr.bf16.mxu0 0
      %694 = vmatpush1.bf16.msra.mxu0 0
      %695 = vmatprep.subr.bf16.mxu0 0
      %696 = vmatpush1.bf16.msra.mxu0 0
      %697 = vmatprep.subr.bf16.mxu0 0
      %698 = vmatpush1.bf16.msra.mxu0 0
      %699 = vmatprep.subr.bf16.mxu0 0
      %700 = vmatpush1.bf16.msra.mxu0 0
      %701 = vmatprep.subr.bf16.mxu0 0
      %702 = vmatpush1.bf16.msra.mxu0 0
      %703 = vmatprep.subr.bf16.mxu0 0
      %704 = vmatpush1.bf16.msra.mxu0 0
      %705 = vmatprep.subr.bf16.mxu0 0
      %706 = vmatpush1.bf16.msra.mxu0 %v686
      %707 = vmatprep.subr.bf16.mxu0 0
      %708 = vmatpush2.bf16.msra.mxu0 0
      %709 = vmatprep.subr.bf16.mxu0 0
      %710 = vmatpush2.bf16.msra.mxu0 0
      %711 = vmatprep.subr.bf16.mxu0 0
      %712 = vmatpush2.bf16.msra.mxu0 0
      %713 = vmatprep.subr.bf16.mxu0 0
      %714 = vmatpush2.bf16.msra.mxu0 0
      %715 = vmatprep.subr.bf16.mxu0 0
      %716 = vmatpush2.bf16.msra.mxu0 0
      %717 = vmatprep.subr.bf16.mxu0 0
      %718 = vmatpush2.bf16.msra.mxu0 0
      %719 = vmatprep.subr.bf16.mxu0 0
      %720 = vmatpush2.bf16.msra.mxu0 0
      %721 = vmatprep.subr.bf16.mxu0 0
      %722 = vmatpush2.bf16.msra.mxu0 0
      %723 = vmatprep.mubr.bf16.mxu0 0
      %724 = vmatmul.mubr.bf16.gmra.mxu0 %v689
      %v725 = vpop.f32.mrf.mxu0
      %v726 = vadd.f32 0.0, %v725
      %v727 = vpop.f32.mrf.mxu0
      %v728 = vpop.f32.mrf.mxu0
      %v729 = vpop.f32.mrf.mxu0
      %730 = vdwg.mxu0
      %v731 = vadd.f32 %v569, %v726
      %v732 = vld [vmem:[%s5] sm:$0x1]
      %v733 = vld [vmem:[%s6] sm:$0x1]
      %v734 = vsel %vm340, %v731, 0.0
      %735 = vadd.xlane.f32.xlu0 %v734
      %v736 = vpop.xlane.xlu0 %735
      %v737 = vrcp.pop 32.0
      %v738 = vmul.f32 %v736, %v737
      %v739 = vsub.f32 %v731, %v738
      %v740 = vmul.f32 %v739, %v739
      %v741 = vsel %vm340, %v740, 0.0
      %742 = vadd.xlane.f32.xlu0 %v741
      %v743 = vpop.xlane.xlu0 %742
      %v744 = vmul.f32 %v743, %v737
      %v745 = vadd.f32 %v744, 1e-12
      %v746 = vrsqrt.pop %v745
      %v747 = vmul.f32 %v739, %v746
      %v749 = vlaneseq
      %v750 = vshrl.u32 %v749, 7
      %v751 = vsub.s32 0, %v750
      %v752 = vrot.slane %v732, %v751
      %v754 = vmul.f32 %v747, %v752
      %v756 = vlaneseq
      %v757 = vshrl.u32 %v756, 7
      %v758 = vsub.s32 0, %v757
      %v759 = vrot.slane %v733, %v758
      %v761 = vadd.f32 %v754, %v759
      %v762 = vpack.c.bf16 %v761, %v761
      %vm763 = vcmask 257024
      %764 = vst.msk [vmem:[%s314] sm:$0xf] %vm763, %v762
      %p765 = scmp.lt.s32.totalorder %s19, 1
      %s766 = scalar_select %p765, %s19, 1
      %s767 = smul.addr %s766, 4
      %s768 = scalar_lea.vmem %s8, %s767
      // Predicated region
      $region53: #{bert_classifier_forward.7} parent=51 // pred_check
        %p769 = pneg %p215
      $region54: #{bert_classifier_forward.7} parent=51 // pred_check_branch
        %771 = sbr.rel (%p769) target = $region56
      $region55: #{bert_classifier_forward.7} parent=51 // pred_region
        _
      $region56: #{bert_classifier_forward.7} parent=51 // pred_fallthru
        _
    $region52: #{bert_classifier_forward.7} parent=5 // pred_fallthru
      _
    %p772 = scmp.le.s32.totalorder 2, %s14
    // Predicated region
    $region57: #{bert_classifier_forward.7} parent=5 // pred_check
      %p773 = pneg %p772
    $region58: #{bert_classifier_forward.7} parent=5 // pred_check_branch
      %775 = sbr.rel (%p773) target = $region60
    $region59: #{bert_classifier_forward.7} parent=5 // pred_region
      %s776 = ssub.s32 %s14, 2
      // Predicated region
      $region61: #{bert_classifier_forward.7} parent=59 // pred_check
        %p777 = pneg %p221
      $region62: #{bert_classifier_forward.7} parent=59 // pred_check_branch
        %779 = sbr.rel (%p777) target = $region64
      $region63: #{bert_classifier_forward.7} parent=59 // pred_region
        %p780 = scmp.lt.s32.totalorder %s20, 1
        %s781 = scalar_select %p780, %s20, 1
        %s782 = smul.addr %s781, 4
        %s783 = scalar_lea.vmem %s8, %s782
      $region64: #{bert_classifier_forward.7} parent=59 // pred_fallthru
        _
    $region60: #{bert_classifier_forward.7} parent=5 // pred_fallthru
      _
  $region6: #{bert_classifier_forward.7} parent=0 // loop_footer
    %s18 = sadd.s32 1, %s14
  $region7: #{bert_classifier_forward.7} parent=0 // loop_footer_branch
    %13 = sbr.rel target = $region3
  $region8: #{bert_classifier_forward.7} parent=0 // loop_exit
    _

// kernel: bert_classifier_forward.8
$region0: #{bert_classifier_forward.8}
  #allocation0 [shape = 'u32[]', space=smem, size = 0x4, offset = 0x4, fixed_abs, tag = 'smem constant byte address 0x4 - core index']
  #allocation1 [shape = 'u32[144,128]{1,0:T(1,128)}', space=vmem, size = 0x12000, scoped, tag = 'internal scratch']
  %s0 = inlined_call_operand.vmem [shape: bf16[16,32], index: 0, kind: input, shape index: {}]
  %s1 = inlined_call_operand.vmem [shape: bf16[32,64], index: 1, kind: input, shape index: {}]
  %s2 = inlined_call_operand.vmem [shape: f32[1,64], index: 2, kind: input, shape index: {}]
  %s3 = inlined_call_operand.vmem [shape: bf16[64,32], index: 3, kind: input, shape index: {}]
  %s4 = inlined_call_operand.vmem [shape: f32[1,32], index: 4, kind: input, shape index: {}]
  %s5 = inlined_call_operand.vmem [shape: f32[1,32], index: 5, kind: input, shape index: {}]
  %s6 = inlined_call_operand.vmem [shape: f32[1,32], index: 6, kind: input, shape index: {}]
  %s7 = inlined_call_operand.vmem [shape: bf16[16,32], index: 7, kind: output, shape index: {}]
  %s8 = sld [smem:[#allocation0]]
  $region61: #{bert_classifier_forward.8} parent=0
    _
  %s10 = ssub.s32 1, %s8
  %s11 = scalar_select 0, %s10, %s8
  loop: start=0, step=1, limit=4
  $region2: #{bert_classifier_forward.8} parent=0 // loop_pre_header
    _
  $region3: #{bert_classifier_forward.8} parent=0 // loop_header
    %s13 = sphi 0, %s17
    %p14 = scmp.ge.s32.totalorder %s13, 4
    %s23 = sphi 0, %s25
    %s26 = sphi 0, %s23
    %s27 = sphi 0, %s26
    %s43 = sphi 0, %s27
    %s47 = sphi 0, %s47
    %s49 = sphi 0, %s47
    %s50 = sphi 0, %s49
    %s64 = sphi 0, %s50
    %s68 = sphi 0, %s68
    %s70 = sphi 0, %s68
    %s71 = sphi 0, %s70
    %s85 = sphi 0, %s71
    %s89 = sphi 0, %s89
    %s91 = sphi 0, %s89
    %s92 = sphi 0, %s91
    %s106 = sphi 0, %s92
    %s110 = sphi 0, %s110
    %s112 = sphi 0, %s110
    %s113 = sphi 0, %s112
    %s127 = sphi 0, %s113
    %s131 = sphi 0, %s131
    %s133 = sphi 0, %s131
    %s134 = sphi 0, %s133
    %s148 = sphi 0, %s134
    %s152 = sphi 0, %s152
    %s154 = sphi 0, %s152
    %s155 = sphi 0, %s154
    %s169 = sphi 0, %s155
    %s175 = sphi 0, %s177
    %s178 = sphi 0, %s175
    %s179 = sphi 0, %s178
    %s195 = sphi 0, %s179
  $region4: #{bert_classifier_forward.8} parent=0 // loop_header_branch
    %16 = sbr.rel (%p14) target = $region8
  $region5: #{bert_classifier_forward.8} parent=0 // loop_body
    %s18 = ssub.s32 %s13, 1
    %s19 = ssub.s32 %s13, 2
    %s20 = sadd.s32 %s13, 1
    %s21 = ssub.s32 %s13, %s20
    %p22 = scmp.eq.s32.totalorder %s21, 0
    %s24 = sadd.s32 %s23, 1
    %s25 = scalar_select %p22, %s23, %s24
    %p28 = pneg %p22
    %p29 = scmp.eq.s32.totalorder %s13, 1
    %p30 = por %p28, %p29
    %p31 = scmp.ne.s32.totalorder %s23, %s26
    %p32 = scmp.eq.s32.totalorder %s13, 0
    %p33 = por %p31, %p32
    %p34 = scmp.ne.s32.totalorder %s23, %s26
    %p35 = scmp.eq.s32.totalorder %s18, 1
    %p36 = por %p34, %p35
    %p37 = scmp.ne.s32.totalorder %s26, %s27
    %p38 = scmp.eq.s32.totalorder %s18, 0
    %p39 = por %p37, %p38
    %p40 = scmp.ne.s32.totalorder %s26, %s27
    %p41 = scmp.eq.s32.totalorder %s19, 1
    %p42 = por %p40, %p41
    %p44 = scmp.ne.s32.totalorder %s27, %s43
    %p45 = scmp.eq.s32.totalorder %s19, 0
    %p46 = por %p44, %p45
    %s48 = sadd.s32 %s47, 1
    %p51 = scmp.eq.s32.totalorder %s13, 1
    %p52 = scmp.ne.s32.totalorder %s47, %s49
    %p53 = scmp.eq.s32.totalorder %s13, 0
    %p54 = por %p52, %p53
    %p55 = scmp.ne.s32.totalorder %s47, %s49
    %p56 = scmp.eq.s32.totalorder %s18, 1
    %p57 = por %p55, %p56
    %p58 = scmp.ne.s32.totalorder %s49, %s50
    %p59 = scmp.eq.s32.totalorder %s18, 0
    %p60 = por %p58, %p59
    %p61 = scmp.ne.s32.totalorder %s49, %s50
    %p62 = scmp.eq.s32.totalorder %s19, 1
    %p63 = por %p61, %p62
    %p65 = scmp.ne.s32.totalorder %s50, %s64
    %p66 = scmp.eq.s32.totalorder %s19, 0
    %p67 = por %p65, %p66
    %s69 = sadd.s32 %s68, 1
    %p72 = scmp.eq.s32.totalorder %s13, 1
    %p73 = scmp.ne.s32.totalorder %s68, %s70
    %p74 = scmp.eq.s32.totalorder %s13, 0
    %p75 = por %p73, %p74
    %p76 = scmp.ne.s32.totalorder %s68, %s70
    %p77 = scmp.eq.s32.totalorder %s18, 1
    %p78 = por %p76, %p77
    %p79 = scmp.ne.s32.totalorder %s70, %s71
    %p80 = scmp.eq.s32.totalorder %s18, 0
    %p81 = por %p79, %p80
    %p82 = scmp.ne.s32.totalorder %s70, %s71
    %p83 = scmp.eq.s32.totalorder %s19, 1
    %p84 = por %p82, %p83
    %p86 = scmp.ne.s32.totalorder %s71, %s85
    %p87 = scmp.eq.s32.totalorder %s19, 0
    %p88 = por %p86, %p87
    %s90 = sadd.s32 %s89, 1
    %p93 = scmp.eq.s32.totalorder %s13, 1
    %p94 = scmp.ne.s32.totalorder %s89, %s91
    %p95 = scmp.eq.s32.totalorder %s13, 0
    %p96 = por %p94, %p95
    %p97 = scmp.ne.s32.totalorder %s89, %s91
    %p98 = scmp.eq.s32.totalorder %s18, 1
    %p99 = por %p97, %p98
    %p100 = scmp.ne.s32.totalorder %s91, %s92
    %p101 = scmp.eq.s32.totalorder %s18, 0
    %p102 = por %p100, %p101
    %p103 = scmp.ne.s32.totalorder %s91, %s92
    %p104 = scmp.eq.s32.totalorder %s19, 1
    %p105 = por %p103, %p104
    %p107 = scmp.ne.s32.totalorder %s92, %s106
    %p108 = scmp.eq.s32.totalorder %s19, 0
    %p109 = por %p107, %p108
    %s111 = sadd.s32 %s110, 1
    %p114 = scmp.eq.s32.totalorder %s13, 1
    %p115 = scmp.ne.s32.totalorder %s110, %s112
    %p116 = scmp.eq.s32.totalorder %s13, 0
    %p117 = por %p115, %p116
    %p118 = scmp.ne.s32.totalorder %s110, %s112
    %p119 = scmp.eq.s32.totalorder %s18, 1
    %p120 = por %p118, %p119
    %p121 = scmp.ne.s32.totalorder %s112, %s113
    %p122 = scmp.eq.s32.totalorder %s18, 0
    %p123 = por %p121, %p122
    %p124 = scmp.ne.s32.totalorder %s112, %s113
    %p125 = scmp.eq.s32.totalorder %s19, 1
    %p126 = por %p124, %p125
    %p128 = scmp.ne.s32.totalorder %s113, %s127
    %p129 = scmp.eq.s32.totalorder %s19, 0
    %p130 = por %p128, %p129
    %s132 = sadd.s32 %s131, 1
    %p135 = scmp.eq.s32.totalorder %s13, 1
    %p136 = scmp.ne.s32.totalorder %s131, %s133
    %p137 = scmp.eq.s32.totalorder %s13, 0
    %p138 = por %p136, %p137
    %p139 = scmp.ne.s32.totalorder %s131, %s133
    %p140 = scmp.eq.s32.totalorder %s18, 1
    %p141 = por %p139, %p140
    %p142 = scmp.ne.s32.totalorder %s133, %s134
    %p143 = scmp.eq.s32.totalorder %s18, 0
    %p144 = por %p142, %p143
    %p145 = scmp.ne.s32.totalorder %s133, %s134
    %p146 = scmp.eq.s32.totalorder %s19, 1
    %p147 = por %p145, %p146
    %p149 = scmp.ne.s32.totalorder %s134, %s148
    %p150 = scmp.eq.s32.totalorder %s19, 0
    %p151 = por %p149, %p150
    %s153 = sadd.s32 %s152, 1
    %p156 = scmp.eq.s32.totalorder %s13, 1
    %p157 = scmp.ne.s32.totalorder %s152, %s154
    %p158 = scmp.eq.s32.totalorder %s13, 0
    %p159 = por %p157, %p158
    %p160 = scmp.ne.s32.totalorder %s152, %s154
    %p161 = scmp.eq.s32.totalorder %s18, 1
    %p162 = por %p160, %p161
    %p163 = scmp.ne.s32.totalorder %s154, %s155
    %p164 = scmp.eq.s32.totalorder %s18, 0
    %p165 = por %p163, %p164
    %p166 = scmp.ne.s32.totalorder %s154, %s155
    %p167 = scmp.eq.s32.totalorder %s19, 1
    %p168 = por %p166, %p167
    %p170 = scmp.ne.s32.totalorder %s155, %s169
    %p171 = scmp.eq.s32.totalorder %s19, 0
    %p172 = por %p170, %p171
    %s173 = ssub.s32 %s13, %s20
    %p174 = scmp.eq.s32.totalorder %s173, 0
    %s176 = sadd.s32 %s175, 1
    %s177 = scalar_select %p174, %s175, %s176
    %p180 = pneg %p174
    %p181 = scmp.eq.s32.totalorder %s13, 1
    %p182 = por %p180, %p181
    %p183 = scmp.ne.s32.totalorder %s175, %s178
    %p184 = scmp.eq.s32.totalorder %s13, 0
    %p185 = por %p183, %p184
    %p186 = scmp.ne.s32.totalorder %s175, %s178
    %p187 = scmp.eq.s32.totalorder %s18, 1
    %p188 = por %p186, %p187
    %p189 = scmp.ne.s32.totalorder %s178, %s179
    %p190 = scmp.eq.s32.totalorder %s18, 0
    %p191 = por %p189, %p190
    %p192 = scmp.ne.s32.totalorder %s178, %s179
    %p193 = scmp.eq.s32.totalorder %s19, 1
    %p194 = por %p192, %p193
    %p196 = scmp.ne.s32.totalorder %s179, %s195
    %p197 = scmp.eq.s32.totalorder %s19, 0
    %p198 = por %p196, %p197
    %p199 = scmp.le.s32.totalorder 1, %s13
    %p200 = scmp.lt.s32.totalorder %s13, 3
    %p201 = pnand %p199, %p200
    %p202 = pneg %p201
    // Predicated region
    $region9: #{bert_classifier_forward.8} parent=5 // pred_check
      _
    $region10: #{bert_classifier_forward.8} parent=5 // pred_check_branch
      %204 = sbr.rel (%p201) target = $region12
    $region11: #{bert_classifier_forward.8} parent=5 // pred_region
      %s205 = ssub.s32 %s13, 1
      // Predicated region
      $region13: #{bert_classifier_forward.8} parent=11 // pred_check
        %p206 = pneg %p60
      $region14: #{bert_classifier_forward.8} parent=11 // pred_check_branch
        %208 = sbr.rel (%p206) target = $region16
      $region15: #{bert_classifier_forward.8} parent=11 // pred_region
        _
      $region16: #{bert_classifier_forward.8} parent=11 // pred_fallthru
        _
      // Predicated region
      $region17: #{bert_classifier_forward.8} parent=11 // pred_check
        %p209 = pneg %p81
      $region18: #{bert_classifier_forward.8} parent=11 // pred_check_branch
        %211 = sbr.rel (%p209) target = $region20
      $region19: #{bert_classifier_forward.8} parent=11 // pred_region
        _
      $region20: #{bert_classifier_forward.8} parent=11 // pred_fallthru
        _
      // Predicated region
      $region21: #{bert_classifier_forward.8} parent=11 // pred_check
        %p212 = pneg %p102
      $region22: #{bert_classifier_forward.8} parent=11 // pred_check_branch
        %214 = sbr.rel (%p212) target = $region24
      $region23: #{bert_classifier_forward.8} parent=11 // pred_region
        _
      $region24: #{bert_classifier_forward.8} parent=11 // pred_fallthru
        _
      // Predicated region
      $region25: #{bert_classifier_forward.8} parent=11 // pred_check
        %p215 = pneg %p123
      $region26: #{bert_classifier_forward.8} parent=11 // pred_check_branch
        %217 = sbr.rel (%p215) target = $region28
      $region27: #{bert_classifier_forward.8} parent=11 // pred_region
        _
      $region28: #{bert_classifier_forward.8} parent=11 // pred_fallthru
        _
      // Predicated region
      $region29: #{bert_classifier_forward.8} parent=11 // pred_check
        %p218 = pneg %p144
      $region30: #{bert_classifier_forward.8} parent=11 // pred_check_branch
        %220 = sbr.rel (%p218) target = $region32
      $region31: #{bert_classifier_forward.8} parent=11 // pred_region
        _
      $region32: #{bert_classifier_forward.8} parent=11 // pred_fallthru
        _
      // Predicated region
      $region33: #{bert_classifier_forward.8} parent=11 // pred_check
        %p221 = pneg %p165
      $region34: #{bert_classifier_forward.8} parent=11 // pred_check_branch
        %223 = sbr.rel (%p221) target = $region36
      $region35: #{bert_classifier_forward.8} parent=11 // pred_region
        _
      $region36: #{bert_classifier_forward.8} parent=11 // pred_fallthru
        _
    $region12: #{bert_classifier_forward.8} parent=5 // pred_fallthru
      _
    %p224 = scmp.lt.s32.totalorder %s13, 2
    // Predicated region
    $region37: #{bert_classifier_forward.8} parent=5 // pred_check
      %p225 = pneg %p224
    $region38: #{bert_classifier_forward.8} parent=5 // pred_check_branch
      %227 = sbr.rel (%p225) target = $region40
    $region39: #{bert_classifier_forward.8} parent=5 // pred_region
      // Predicated region
      $region41: #{bert_classifier_forward.8} parent=39 // pred_check
        %p228 = pneg %p33
      $region42: #{bert_classifier_forward.8} parent=39 // pred_check_branch
        %230 = sbr.rel (%p228) target = $region44
      $region43: #{bert_classifier_forward.8} parent=39 // pred_region
        %p231 = scmp.lt.s32.totalorder %s13, 1
        %s232 = scalar_select %p231, %s13, 1
        %s233 = smul.addr %s232, 4
        %s234 = scalar_lea.vmem %s0, %s233
      $region44: #{bert_classifier_forward.8} parent=39 // pred_fallthru
        _
    $region40: #{bert_classifier_forward.8} parent=5 // pred_fallthru
      _
    %p235 = scmp.le.s32.totalorder 1, %s13
    %p236 = scmp.lt.s32.totalorder %s13, 3
    %p237 = pnand %p235, %p236
    %p238 = pneg %p237
    // Predicated region
    $region45: #{bert_classifier_forward.8} parent=5 // pred_check
      _
    $region46: #{bert_classifier_forward.8} parent=5 // pred_check_branch
      %240 = sbr.rel (%p237) target = $region48
    $region47: #{bert_classifier_forward.8} parent=5 // pred_region
      %s241 = ssub.s32 %s13, 1
      %p242 = scmp.lt.s32.totalorder %s18, 1
      %s243 = scalar_select %p242, %s18, 1
      %s244 = smul.addr %s243, 4
      %s245 = scalar_lea.vmem %s0, %s244
      %p246 = pneg %p39
      %p247 = pneg %p36
      %p248 = pneg %p60
      %p249 = pneg %p57
      %p250 = pneg %p81
      %p251 = pneg %p78
      %p252 = pneg %p102
      %p253 = pneg %p99
      %p254 = pneg %p123
      %p255 = pneg %p120
      %p256 = pneg %p144
      %p257 = pneg %p141
      %p258 = pneg %p165
      %p259 = pneg %p162
      %p260 = pneg %p191
      %p261 = pneg %p188
      %p262 = scmp.lt.s32.totalorder %s18, 1
      %s263 = scalar_select %p262, %s18, 1
      %s264 = smul.addr %s263, 4
      %s265 = scalar_lea.vmem %s7, %s264
      %p266 = scmp.lt.s32.totalorder %s18, 1
      %s267 = scalar_select %p266, %s18, 1
      %s268 = smul.addr %s267, 4
      %s269 = scalar_lea.vmem %s0, %s268
      %p270 = scmp.lt.s32.totalorder %s18, 1
      %s271 = scalar_select %p270, %s18, 1
      %s272 = smul.addr %s271, 4
      %s273 = scalar_lea.vmem %s7, %s272
      %v275 = vld [vmem:[%s269] sm:$0xf]
      %v276 = vld [vmem:[%s1] sm:$0xf]
      %v277 = vld [vmem:[%s1 + $0x4] sm:$0xf]
      %v278 = vld [vmem:[%s1 + $0x8] sm:$0xf]
      %v279 = vld [vmem:[%s1 + $0xc] sm:$0xf]
      %v280 = vld [vmem:[%s2] sm:$0x1]
      %v282 = vlaneseq
      %v283 = vshrl.u32 %v282, 7
      %v284 = vsub.s32 0, %v283
      %v285 = vrot.slane %v280, %v284
      %v291 = vunpack.c.l.b16 %v276
      %v292 = vunpack.c.l.b16 %v277
      %v293 = vunpack.c.l.b16 %v278
      %v294 = vunpack.c.l.b16 %v279
      %v295 = vpack.c.b16 %v292, %v291
      %v296 = vpack.c.b16 %v294, %v293
      %vm299 = vcmask 261120
      %v301 = vsel %vm299, %v275, 0
      %303 = vmatprep.subr.bf16.mxu0 0
      %304 = vmatpush1.bf16.msra.mxu0 0
      %305 = vmatprep.subr.bf16.mxu0 0
      %306 = vmatpush1.bf16.msra.mxu0 0
      %307 = vmatprep.subr.bf16.mxu0 0
      %308 = vmatpush1.bf16.msra.mxu0 0
      %309 = vmatprep.subr.bf16.mxu0 0
      %310 = vmatpush1.bf16.msra.mxu0 0
      %311 = vmatprep.subr.bf16.mxu0 0
      %312 = vmatpush1.bf16.msra.mxu0 0
      %313 = vmatprep.subr.bf16.mxu0 0
      %314 = vmatpush1.bf16.msra.mxu0 0
      %315 = vmatprep.subr.bf16.mxu0 0
      %316 = vmatpush1.bf16.msra.mxu0 %v296
      %317 = vmatprep.subr.bf16.mxu0 0
      %318 = vmatpush1.bf16.msra.mxu0 %v295
      %319 = vmatprep.subr.bf16.mxu0 0
      %320 = vmatpush2.bf16.msra.mxu0 0
      %321 = vmatprep.subr.bf16.mxu0 0
      %322 = vmatpush2.bf16.msra.mxu0 0
      %323 = vmatprep.subr.bf16.mxu0 0
      %324 = vmatpush2.bf16.msra.mxu0 0
      %325 = vmatprep.subr.bf16.mxu0 0
      %326 = vmatpush2.bf16.msra.mxu0 0
      %327 = vmatprep.subr.bf16.mxu0 0
      %328 = vmatpush2.bf16.msra.mxu0 0
      %329 = vmatprep.subr.bf16.mxu0 0
      %330 = vmatpush2.bf16.msra.mxu0 0
      %331 = vmatprep.subr.bf16.mxu0 0
      %332 = vmatpush2.bf16.msra.mxu0 0
      %333 = vmatprep.subr.bf16.mxu0 0
      %334 = vmatpush2.bf16.msra.mxu0 0
      %335 = vmatprep.mubr.bf16.mxu0 0
      %336 = vmatmul.mubr.bf16.gmra.mxu0 %v301
      %v337 = vpop.f32.mrf.mxu0
      %v338 = vadd.f32 %v285, %v337
      %v339 = vpop.f32.mrf.mxu0
      %v340 = vpop.f32.mrf.mxu0
      %v341 = vpop.f32.mrf.mxu0
      %342 = vdwg.mxu0
      %v343 = vmul.f32 %v338, 0.5
      %v344 = vmul.f32 %v338, 0.044715
      %v345 = vmul.f32 %v344, %v338
      %v346 = vmul.f32 %v345, %v338
      %v347 = vadd.f32 %v338, %v346
      %v348 = vmul.f32 %v347, 0.7978846
      %v349 = vtanh.pop %v348
      %v350 = vadd.f32 %v349, 1.0
      %v351 = vmul.f32 %v343, %v350
      %v352 = vpack.c.bf16 %v351, %v351
      %v353 = vld [vmem:[%s3] sm:$0xf]
      %v354 = vld [vmem:[%s3 + $0x4] sm:$0xf]
      %v355 = vld [vmem:[%s3 + $0x8] sm:$0xf]
      %v356 = vld [vmem:[%s3 + $0xc] sm:$0xf]
      %v357 = vld [vmem:[%s3 + $0x10] sm:$0xf]
      %v358 = vld [vmem:[%s3 + $0x14] sm:$0xf]
      %v359 = vld [vmem:[%s3 + $0x18] sm:$0xf]
      %v360 = vld [vmem:[%s3 + $0x1c] sm:$0xf]
      %v361 = vld [vmem:[%s4] sm:$0x1]
      %v363 = vlaneseq
      %v364 = vshrl.u32 %v363, 7
      %v365 = vsub.s32 0, %v364
      %v366 = vrot.slane %v361, %v365
      %v376 = vunpack.c.l.b16 %v353
      %v377 = vunpack.c.l.b16 %v354
      %v378 = vunpack.c.l.b16 %v355
      %v379 = vunpack.c.l.b16 %v356
      %v380 = vunpack.c.l.b16 %v357
      %v381 = vunpack.c.l.b16 %v358
      %v382 = vunpack.c.l.b16 %v359
      %v383 = vunpack.c.l.b16 %v360
      %v384 = vpack.c.b16 %v377, %v376
      %v385 = vpack.c.b16 %v379, %v378
      %v386 = vpack.c.b16 %v381, %v380
      %v387 = vpack.c.b16 %v383, %v382
      %vm392 = vcmask 523264
      %v394 = vsel %vm392, %v352, 0
      %396 = vmatprep.subr.bf16.mxu0 0
      %397 = vmatpush1.bf16.msra.mxu0 0
      %398 = vmatprep.subr.bf16.mxu0 0
      %399 = vmatpush1.bf16.msra.mxu0 0
      %400 = vmatprep.subr.bf16.mxu0 0
      %401 = vmatpush1.bf16.msra.mxu0 0
      %402 = vmatprep.subr.bf16.mxu0 0
      %403 = vmatpush1.bf16.msra.mxu0 0
      %404 = vmatprep.subr.bf16.mxu0 0
      %405 = vmatpush1.bf16.msra.mxu0 %v387
      %406 = vmatprep.subr.bf16.mxu0 0
      %407 = vmatpush1.bf16.msra.mxu0 %v386
      %408 = vmatprep.subr.bf16.mxu0 0
      %409 = vmatpush1.bf16.msra.mxu0 %v385
      %410 = vmatprep.subr.bf16.mxu0 0
      %411 = vmatpush1.bf16.msra.mxu0 %v384
      %412 = vmatprep.subr.bf16.mxu0 0
      %413 = vmatpush2.bf16.msra.mxu0 0
      %414 = vmatprep.subr.bf16.mxu0 0
      %415 = vmatpush2.bf16.msra.mxu0 0
      %416 = vmatprep.subr.bf16.mxu0 0
      %417 = vmatpush2.bf16.msra.mxu0 0
      %418 = vmatprep.subr.bf16.mxu0 0
      %419 = vmatpush2.bf16.msra.mxu0 0
      %420 = vmatprep.subr.bf16.mxu0 0
      %421 = vmatpush2.bf16.msra.mxu0 0
      %422 = vmatprep.subr.bf16.mxu0 0
      %423 = vmatpush2.bf16.msra.mxu0 0
      %424 = vmatprep.subr.bf16.mxu0 0
      %425 = vmatpush2.bf16.msra.mxu0 0
      %426 = vmatprep.subr.bf16.mxu0 0
      %427 = vmatpush2.bf16.msra.mxu0 0
      %428 = vmatprep.mubr.bf16.mxu0 0
      %429 = vmatmul.mubr.bf16.gmra.mxu0 %v394
      %v430 = vpop.f32.mrf.mxu0
      %v431 = vadd.f32 %v366, %v430
      %v432 = vpop.f32.mrf.mxu0
      %v433 = vpop.f32.mrf.mxu0
      %v434 = vpop.f32.mrf.mxu0
      %435 = vdwg.mxu0
      %v436 = vunpack.c.l.bf16 %v275
      %v437 = vadd.f32 %v431, %v436
      %v438 = vld [vmem:[%s5] sm:$0x1]
      %v439 = vld [vmem:[%s6] sm:$0x1]
      %v440 = vsel %vm299, %v437, 0.0
      %441 = vadd.xlane.f32.xlu0 %v440
      %v442 = vpop.xlane.xlu0 %441
      %v443 = vrcp.pop 32.0
      %v444 = vmul.f32 %v442, %v443
      %v445 = vsub.f32 %v437, %v444
      %v446 = vmul.f32 %v445, %v445
      %v447 = vsel %vm299, %v446, 0.0
      %448 = vadd.xlane.f32.xlu0 %v447
      %v449 = vpop.xlane.xlu0 %448
      %v450 = vmul.f32 %v449, %v443
      %v451 = vadd.f32 %v450, 1e-12
      %v452 = vrsqrt.pop %v451
      %v453 = vmul.f32 %v445, %v452
      %v455 = vlaneseq
      %v456 = vshrl.u32 %v455, 7
      %v457 = vsub.s32 0, %v456
      %v458 = vrot.slane %v438, %v457
      %v460 = vmul.f32 %v453, %v458
      %v462 = vlaneseq
      %v463 = vshrl.u32 %v462, 7
      %v464 = vsub.s32 0, %v463
      %v465 = vrot.slane %v439, %v464
      %v467 = vadd.f32 %v460, %v465
      %v468 = vpack.c.bf16 %v467, %v467
      %vm469 = vcmask 257024
      %470 = vst.msk [vmem:[%s273] sm:$0xf] %vm469, %v468
      %p471 = scmp.lt.s32.totalorder %s18, 1
      %s472 = scalar_select %p471, %s18, 1
      %s473 = smul.addr %s472, 4
      %s474 = scalar_lea.vmem %s7, %s473
      // Predicated region
      $region49: #{bert_classifier_forward.8} parent=47 // pred_check
        %p475 = pneg %p188
      $region50: #{bert_classifier_forward.8} parent=47 // pred_check_branch
        %477 = sbr.rel (%p475) target = $region52
      $region51: #{bert_classifier_forward.8} parent=47 // pred_region
        _
      $region52: #{bert_classifier_forward.8} parent=47 // pred_fallthru
        _
    $region48: #{bert_classifier_forward.8} parent=5 // pred_fallthru
      _
    %p478 = scmp.le.s32.totalorder 2, %s13
    // Predicated region
    $region53: #{bert_classifier_forward.8} parent=5 // pred_check
      %p479 = pneg %p478
    $region54: #{bert_classifier_forward.8} parent=5 // pred_check_branch
      %481 = sbr.rel (%p479) target = $region56
    $region55: #{bert_classifier_forward.8} parent=5 // pred_region
      %s482 = ssub.s32 %s13, 2
      // Predicated region
      $region57: #{bert_classifier_forward.8} parent=55 // pred_check
        %p483 = pneg %p194
      $region58: #{bert_classifier_forward.8} parent=55 // pred_check_branch
        %485 = sbr.rel (%p483) target = $region60
      $region59: #{bert_classifier_forward.8} parent=55 // pred_region
        %p486 = scmp.lt.s32.totalorder %s19, 1
        %s487 = scalar_select %p486, %s19, 1
        %s488 = smul.addr %s487, 4
        %s489 = scalar_lea.vmem %s7, %s488
      $region60: #{bert_classifier_forward.8} parent=55 // pred_fallthru
        _
    $region56: #{bert_classifier_forward.8} parent=5 // pred_fallthru
      _
  $region6: #{bert_classifier_forward.8} parent=0 // loop_footer
    %s17 = sadd.s32 1, %s13
  $region7: #{bert_classifier_forward.8} parent=0 // loop_footer_branch
    %12 = sbr.rel target = $region3
  $region8: #{bert_classifier_forward.8} parent=0 // loop_exit
    _

// kernel: bert_classifier_forward.11
$region0: #{bert_classifier_forward.11}
  #allocation0 [shape = 'u32[]', space=smem, size = 0x4, offset = 0x4, fixed_abs, tag = 'smem constant byte address 0x4 - core index']
  #allocation1 [shape = 'u32[144,128]{1,0:T(1,128)}', space=vmem, size = 0x12000, scoped, tag = 'internal scratch']
  %s0 = inlined_call_operand.vmem [shape: bf16[2,32], index: 0, kind: input, shape index: {}]
  %s1 = inlined_call_operand.vmem [shape: bf16[32,32], index: 1, kind: input, shape index: {}]
  %s2 = inlined_call_operand.vmem [shape: f32[1,32], index: 2, kind: input, shape index: {}]
  %s3 = inlined_call_operand.vmem [shape: bf16[32,16], index: 3, kind: input, shape index: {}]
  %s4 = inlined_call_operand.vmem [shape: f32[1,16], index: 4, kind: input, shape index: {}]
  %s5 = inlined_call_operand.vmem [shape: f32[1,16], index: 5, kind: input, shape index: {}]
  %s6 = inlined_call_operand.vmem [shape: f32[1,16], index: 6, kind: input, shape index: {}]
  %s7 = inlined_call_operand.vmem [shape: f32[1,16], index: 7, kind: input, shape index: {}]
  %s8 = inlined_call_operand.vmem [shape: f32[1,16], index: 8, kind: input, shape index: {}]
  %s9 = inlined_call_operand.vmem [shape: bf16[16,128], index: 9, kind: input, shape index: {}]
  %s10 = inlined_call_operand.vmem [shape: f32[1,128], index: 10, kind: input, shape index: {}]
  %s11 = inlined_call_operand.hbm [shape: f32[2,128], index: 11, kind: output, shape index: {}]
  %s12 = sld [smem:[#allocation0]]
  $region54: #{bert_classifier_forward.11} parent=0
    _
  %s14 = ssub.s32 1, %s12
  %s15 = scalar_select 0, %s14, %s12
  $region1: #{bert_classifier_forward.11} parent=0
    #allocation2 [shape = 'u8[1024]{0}', space=vmem, size = 0x400, scoped, tag = 'output window, operand 0, single buffered']
    #allocation3 [shape = 's32[1]{0}', space=sflag, size = 0x4, scoped, tag = 'scoped memory for bert_classifier_forward.11']
    %16 = vsyncpa [#allocation3], 0
    // Predicated region
    $region2: #{bert_classifier_forward.11} parent=1 // pred_check
      _
    $region3: #{bert_classifier_forward.11} parent=1 // pred_check_branch
      %18 = sbr.rel (0) target = $region5
    $region4: #{bert_classifier_forward.11} parent=1 // pred_region
      _
    $region5: #{bert_classifier_forward.11} parent=1 // pred_fallthru
      _
    // Predicated region
    $region6: #{bert_classifier_forward.11} parent=1 // pred_check
      _
    $region7: #{bert_classifier_forward.11} parent=1 // pred_check_branch
      %20 = sbr.rel (0) target = $region9
    $region8: #{bert_classifier_forward.11} parent=1 // pred_region
      _
    $region9: #{bert_classifier_forward.11} parent=1 // pred_fallthru
      _
    // Predicated region
    $region10: #{bert_classifier_forward.11} parent=1 // pred_check
      _
    $region11: #{bert_classifier_forward.11} parent=1 // pred_check_branch
      %22 = sbr.rel (0) target = $region13
    $region12: #{bert_classifier_forward.11} parent=1 // pred_region
      _
    $region13: #{bert_classifier_forward.11} parent=1 // pred_fallthru
      _
    // Predicated region
    $region14: #{bert_classifier_forward.11} parent=1 // pred_check
      _
    $region15: #{bert_classifier_forward.11} parent=1 // pred_check_branch
      %24 = sbr.rel (0) target = $region17
    $region16: #{bert_classifier_forward.11} parent=1 // pred_region
      _
    $region17: #{bert_classifier_forward.11} parent=1 // pred_fallthru
      _
    // Predicated region
    $region18: #{bert_classifier_forward.11} parent=1 // pred_check
      _
    $region19: #{bert_classifier_forward.11} parent=1 // pred_check_branch
      %26 = sbr.rel (0) target = $region21
    $region20: #{bert_classifier_forward.11} parent=1 // pred_region
      _
    $region21: #{bert_classifier_forward.11} parent=1 // pred_fallthru
      _
    // Predicated region
    $region22: #{bert_classifier_forward.11} parent=1 // pred_check
      _
    $region23: #{bert_classifier_forward.11} parent=1 // pred_check_branch
      %28 = sbr.rel (0) target = $region25
    $region24: #{bert_classifier_forward.11} parent=1 // pred_region
      _
    $region25: #{bert_classifier_forward.11} parent=1 // pred_fallthru
      _
    // Predicated region
    $region26: #{bert_classifier_forward.11} parent=1 // pred_check
      _
    $region27: #{bert_classifier_forward.11} parent=1 // pred_check_branch
      %30 = sbr.rel (0) target = $region29
    $region28: #{bert_classifier_forward.11} parent=1 // pred_region
      _
    $region29: #{bert_classifier_forward.11} parent=1 // pred_fallthru
      _
    // Predicated region
    $region30: #{bert_classifier_forward.11} parent=1 // pred_check
      _
    $region31: #{bert_classifier_forward.11} parent=1 // pred_check_branch
      %32 = sbr.rel (0) target = $region33
    $region32: #{bert_classifier_forward.11} parent=1 // pred_region
      _
    $region33: #{bert_classifier_forward.11} parent=1 // pred_fallthru
      _
    // Predicated region
    $region34: #{bert_classifier_forward.11} parent=1 // pred_check
      _
    $region35: #{bert_classifier_forward.11} parent=1 // pred_check_branch
      %34 = sbr.rel (0) target = $region37
    $region36: #{bert_classifier_forward.11} parent=1 // pred_region
      _
    $region37: #{bert_classifier_forward.11} parent=1 // pred_fallthru
      _
    // Predicated region
    $region38: #{bert_classifier_forward.11} parent=1 // pred_check
      _
    $region39: #{bert_classifier_forward.11} parent=1 // pred_check_branch
      %36 = sbr.rel (0) target = $region41
    $region40: #{bert_classifier_forward.11} parent=1 // pred_region
      _
    $region41: #{bert_classifier_forward.11} parent=1 // pred_fallthru
      _
    // Predicated region
    $region42: #{bert_classifier_forward.11} parent=1 // pred_check
      _
    $region43: #{bert_classifier_forward.11} parent=1 // pred_check_branch
      %38 = sbr.rel (0) target = $region45
    $region44: #{bert_classifier_forward.11} parent=1 // pred_region
      _
    $region45: #{bert_classifier_forward.11} parent=1 // pred_fallthru
      _
    %v40 = vld [vmem:[%s0] sm:$0x1]
    %v41 = vld [vmem:[%s1] sm:$0xf]
    %v42 = vld [vmem:[%s1 + $0x4] sm:$0xf]
    %v43 = vld [vmem:[%s1 + $0x8] sm:$0xf]
    %v44 = vld [vmem:[%s1 + $0xc] sm:$0xf]
    %v45 = vld [vmem:[%s2] sm:$0x1]
    %v47 = vlaneseq
    %v48 = vshrl.u32 %v47, 7
    %v49 = vsub.s32 0, %v48
    %v50 = vrot.slane %v45, %v49
    %v56 = vunpack.c.l.b16 %v41
    %v57 = vunpack.c.l.b16 %v42
    %v58 = vunpack.c.l.b16 %v43
    %v59 = vunpack.c.l.b16 %v44
    %v60 = vpack.c.b16 %v57, %v56
    %v61 = vpack.c.b16 %v59, %v58
    %vm64 = vcmask 261120
    %v66 = vsel %vm64, %v40, 0
    %68 = vmatprep.subr.bf16.mxu0 0
    %69 = vmatpush1.bf16.msra.mxu0 0
    %70 = vmatprep.subr.bf16.mxu0 0
    %71 = vmatpush1.bf16.msra.mxu0 0
    %72 = vmatprep.subr.bf16.mxu0 0
    %73 = vmatpush1.bf16.msra.mxu0 0
    %74 = vmatprep.subr.bf16.mxu0 0
    %75 = vmatpush1.bf16.msra.mxu0 0
    %76 = vmatprep.subr.bf16.mxu0 0
    %77 = vmatpush1.bf16.msra.mxu0 0
    %78 = vmatprep.subr.bf16.mxu0 0
    %79 = vmatpush1.bf16.msra.mxu0 0
    %80 = vmatprep.subr.bf16.mxu0 0
    %81 = vmatpush1.bf16.msra.mxu0 %v61
    %82 = vmatprep.subr.bf16.mxu0 0
    %83 = vmatpush1.bf16.msra.mxu0 %v60
    %84 = vmatprep.subr.bf16.mxu0 0
    %85 = vmatpush2.bf16.msra.mxu0 0
    %86 = vmatprep.subr.bf16.mxu0 0
    %87 = vmatpush2.bf16.msra.mxu0 0
    %88 = vmatprep.subr.bf16.mxu0 0
    %89 = vmatpush2.bf16.msra.mxu0 0
    %90 = vmatprep.subr.bf16.mxu0 0
    %91 = vmatpush2.bf16.msra.mxu0 0
    %92 = vmatprep.subr.bf16.mxu0 0
    %93 = vmatpush2.bf16.msra.mxu0 0
    %94 = vmatprep.subr.bf16.mxu0 0
    %95 = vmatpush2.bf16.msra.mxu0 0
    %96 = vmatprep.subr.bf16.mxu0 0
    %97 = vmatpush2.bf16.msra.mxu0 0
    %98 = vmatprep.subr.bf16.mxu0 0
    %99 = vmatpush2.bf16.msra.mxu0 0
    %100 = vmatprep.mubr.bf16.mxu0 0
    %101 = vmatmul.mubr.bf16.gmra.mxu0 %v66
    %v102 = vpop.f32.mrf.mxu0
    %v103 = vadd.f32 %v50, %v102
    %v104 = vpop.f32.mrf.mxu0
    %v105 = vpop.f32.mrf.mxu0
    %v106 = vpop.f32.mrf.mxu0
    %107 = vdwg.mxu0
    %v108 = vtanh.pop %v103
    %v109 = vpack.c.bf16 %v108, %v108
    %v110 = vld [vmem:[%s3] sm:$0xf]
    %v111 = vld [vmem:[%s3 + $0x4] sm:$0xf]
    %v112 = vld [vmem:[%s3 + $0x8] sm:$0xf]
    %v113 = vld [vmem:[%s3 + $0xc] sm:$0xf]
    %v114 = vld [vmem:[%s4] sm:$0x1]
    %v116 = vlaneseq
    %v117 = vshrl.u32 %v116, 7
    %v118 = vsub.s32 0, %v117
    %v119 = vrot.slane %v114, %v118
    %v125 = vunpack.c.l.b16 %v110
    %v126 = vunpack.c.l.b16 %v111
    %v127 = vunpack.c.l.b16 %v112
    %v128 = vunpack.c.l.b16 %v113
    %v129 = vpack.c.b16 %v126, %v125
    %v130 = vpack.c.b16 %v128, %v127
    %v134 = vsel %vm64, %v109, 0
    %136 = vmatprep.subr.bf16.mxu0 0
    %137 = vmatpush1.bf16.msra.mxu0 0
    %138 = vmatprep.subr.bf16.mxu0 0
    %139 = vmatpush1.bf16.msra.mxu0 0
    %140 = vmatprep.subr.bf16.mxu0 0
    %141 = vmatpush1.bf16.msra.mxu0 0
    %142 = vmatprep.subr.bf16.mxu0 0
    %143 = vmatpush1.bf16.msra.mxu0 0
    %144 = vmatprep.subr.bf16.mxu0 0
    %145 = vmatpush1.bf16.msra.mxu0 0
    %146 = vmatprep.subr.bf16.mxu0 0
    %147 = vmatpush1.bf16.msra.mxu0 0
    %148 = vmatprep.subr.bf16.mxu0 0
    %149 = vmatpush1.bf16.msra.mxu0 %v130
    %150 = vmatprep.subr.bf16.mxu0 0
    %151 = vmatpush1.bf16.msra.mxu0 %v129
    %152 = vmatprep.subr.bf16.mxu0 0
    %153 = vmatpush2.bf16.msra.mxu0 0
    %154 = vmatprep.subr.bf16.mxu0 0
    %155 = vmatpush2.bf16.msra.mxu0 0
    %156 = vmatprep.subr.bf16.mxu0 0
    %157 = vmatpush2.bf16.msra.mxu0 0
    %158 = vmatprep.subr.bf16.mxu0 0
    %159 = vmatpush2.bf16.msra.mxu0 0
    %160 = vmatprep.subr.bf16.mxu0 0
    %161 = vmatpush2.bf16.msra.mxu0 0
    %162 = vmatprep.subr.bf16.mxu0 0
    %163 = vmatpush2.bf16.msra.mxu0 0
    %164 = vmatprep.subr.bf16.mxu0 0
    %165 = vmatpush2.bf16.msra.mxu0 0
    %166 = vmatprep.subr.bf16.mxu0 0
    %167 = vmatpush2.bf16.msra.mxu0 0
    %168 = vmatprep.mubr.bf16.mxu0 0
    %169 = vmatmul.mubr.bf16.gmra.mxu0 %v134
    %v170 = vpop.f32.mrf.mxu0
    %v171 = vadd.f32 %v119, %v170
    %v172 = vpop.f32.mrf.mxu0
    %v173 = vpop.f32.mrf.mxu0
    %v174 = vpop.f32.mrf.mxu0
    %175 = vdwg.mxu0
    %v176 = vld [vmem:[%s7] sm:$0x1]
    %v178 = vlaneseq
    %v179 = vshrl.u32 %v178, 7
    %v180 = vsub.s32 0, %v179
    %v181 = vrot.slane %v176, %v180
    %v183 = vsub.f32 %v171, %v181
    %v184 = vld [vmem:[%s8] sm:$0x1]
    %v185 = vadd.f32 %v184, 1e-05
    %v186 = vrsqrt.pop %v185
    %v188 = vlaneseq
    %v189 = vshrl.u32 %v188, 7
    %v190 = vsub.s32 0, %v189
    %v191 = vrot.slane %v186, %v190
    %v193 = vmul.f32 %v183, %v191
    %v194 = vld [vmem:[%s5] sm:$0x1]
    %v196 = vlaneseq
    %v197 = vshrl.u32 %v196, 7
    %v198 = vsub.s32 0, %v197
    %v199 = vrot.slane %v194, %v198
    %v201 = vmul.f32 %v193, %v199
    %v202 = vld [vmem:[%s6] sm:$0x1]
    %v204 = vlaneseq
    %v205 = vshrl.u32 %v204, 7
    %v206 = vsub.s32 0, %v205
    %v207 = vrot.slane %v202, %v206
    %v209 = vadd.f32 %v201, %v207
    %v210 = vmax.f32 %v209, 0.0
    %v211 = vpack.c.bf16 %v210, %v210
    %v212 = vld [vmem:[%s9] sm:$0xf]
    %v213 = vld [vmem:[%s9 + $0x4] sm:$0xf]
    %v214 = vld [vmem:[%s10] sm:$0x1]
    %v216 = vlaneseq
    %v217 = vshrl.u32 %v216, 7
    %v218 = vsub.s32 0, %v217
    %v219 = vrot.slane %v214, %v218
    %v223 = vunpack.c.l.b16 %v212
    %v224 = vunpack.c.l.b16 %v213
    %v225 = vpack.c.b16 %v224, %v223
    %vm227 = vcmask 130048
    %v229 = vsel %vm227, %v211, 0
    %231 = vmatprep.subr.bf16.mxu0 0
    %232 = vmatpush1.bf16.msra.mxu0 0
    %233 = vmatprep.subr.bf16.mxu0 0
    %234 = vmatpush1.bf16.msra.mxu0 0
    %235 = vmatprep.subr.bf16.mxu0 0
    %236 = vmatpush1.bf16.msra.mxu0 0
    %237 = vmatprep.subr.bf16.mxu0 0
    %238 = vmatpush1.bf16.msra.mxu0 0
    %239 = vmatprep.subr.bf16.mxu0 0
    %240 = vmatpush1.bf16.msra.mxu0 0
    %241 = vmatprep.subr.bf16.mxu0 0
    %242 = vmatpush1.bf16.msra.mxu0 0
    %243 = vmatprep.subr.bf16.mxu0 0
    %244 = vmatpush1.bf16.msra.mxu0 0
    %245 = vmatprep.subr.bf16.mxu0 0
    %246 = vmatpush1.bf16.msra.mxu0 %v225
    %247 = vmatprep.subr.bf16.mxu0 0
    %248 = vmatpush2.bf16.msra.mxu0 0
    %249 = vmatprep.subr.bf16.mxu0 0
    %250 = vmatpush2.bf16.msra.mxu0 0
    %251 = vmatprep.subr.bf16.mxu0 0
    %252 = vmatpush2.bf16.msra.mxu0 0
    %253 = vmatprep.subr.bf16.mxu0 0
    %254 = vmatpush2.bf16.msra.mxu0 0
    %255 = vmatprep.subr.bf16.mxu0 0
    %256 = vmatpush2.bf16.msra.mxu0 0
    %257 = vmatprep.subr.bf16.mxu0 0
    %258 = vmatpush2.bf16.msra.mxu0 0
    %259 = vmatprep.subr.bf16.mxu0 0
    %260 = vmatpush2.bf16.msra.mxu0 0
    %261 = vmatprep.subr.bf16.mxu0 0
    %262 = vmatpush2.bf16.msra.mxu0 0
    %263 = vmatprep.mubr.bf16.mxu0 0
    %264 = vmatmul.mubr.bf16.gmra.mxu0 %v229
    %v265 = vpop.f32.mrf.mxu0
    %v266 = vadd.f32 %v219, %v265
    %v267 = vpop.f32.mrf.mxu0
    %v268 = vpop.f32.mrf.mxu0
    %v269 = vpop.f32.mrf.mxu0
    %270 = vdwg.mxu0
    %vm271 = vcmask 1041408
    %v272 = vsel %vm271, %v266, -inf
    %273 = vmax.xlane.f32.xlu0 %v272
    %v274 = vpop.xlane.xlu0 %273
    %v275 = vsub.f32 %v266, %v274
    %v276 = vmul.f32 %v275, 1.442695
    %v277 = vpow.pop %v276
    %v278 = vsel %vm271, %v277, 0.0
    %279 = vadd.xlane.f32.xlu0 %v278
    %v280 = vpop.xlane.xlu0 %279
    %v281 = vrcp.pop %v280
    %v282 = vmul.f32 %v277, %v281
    %283 = vst [vmem:[#allocation2] sm:$0x3] %v282
    // Predicated region
    $region46: #{bert_classifier_forward.11} parent=1 // pred_check
      _
    $region47: #{bert_classifier_forward.11} parent=1 // pred_check_branch
      %285 = sbr.rel (0) target = $region49
    $region48: #{bert_classifier_forward.11} parent=1 // pred_region
      %s287 = ssub.s32 32, 32
      %288 = vsyncadd [#allocation3], %s287
      %s290 = sshll.u32 [#allocation2], 4
      %s291 = int_to_ptr.vmem [resolvable:$true] %s290
      %293 = dma.vmem_to_hbm [thread:$0]  %s291, 32, %s11, [#allocation3]
    $region49: #{bert_classifier_forward.11} parent=1 // pred_fallthru
      _
    // Predicated region
    $region50: #{bert_classifier_forward.11} parent=1 // pred_check
      _
    $region51: #{bert_classifier_forward.11} parent=1 // pred_check_branch
      %295 = sbr.rel (0) target = $region53
    $region52: #{bert_classifier_forward.11} parent=1 // pred_region
      %296 = dma.done [#allocation3], 32
    $region53: #{bert_classifier_forward.11} parent=1 // pred_fallthru
      _
    %297 = vsyncpa [#allocation3], 1

</llo_original>
